<compile_context>
chip_gen: v5e
topology: v5e:2x2
jax: 0.10.0
libtpu: 0.0.40
codegen_flags: <defaults>
</compile_context>

<pallas_src>
import jax
import jax.numpy as jnp
from jax import lax
from jax.experimental import pallas as pl
from jax.experimental.pallas import tpu as pltpu


def _linear_kernel(x_ref, w_ref, b_ref, o_ref):
    # x_ref: (bm, K)  w_ref: (N, K)  b_ref: (1, N)  o_ref: (bm, N)
    # Contract over the last axis of both operands (PyTorch Linear: x @ W^T),
    # keeping the weight tile lane-dense in VMEM.  f32 accumulation on the MXU.
    o_ref[...] = (
        lax.dot_general(
            x_ref[...], w_ref[...],
            dimension_numbers=(((1,), (1,)), ((), ())),
            preferred_element_type=jnp.float32,
        )
        + b_ref[...]
    ).astype(o_ref.dtype)


def simple_cnn_forward(x_nchw, weight, bias):
    """Forward pass of SimpleCNN.

    x_nchw : (B, C, H, W) float32
    weight : (num_classes, in_features) float32  (PyTorch Linear layout, NOT transposed)
    bias   : (num_classes,) float32
    returns: (B, num_classes) float32
    """
    B = x_nchw.shape[0]
    x_flat = x_nchw.reshape(B, -1)          # == torch x.view(x.size(0), -1) (row-major)
    K = x_flat.shape[1]
    N = weight.shape[0]
    b2d = bias.reshape(1, N)

    # Batch tile: whole batch for small B (single grid step); 256-row tiles once
    # B grows (keeps the double-buffered x tile ~24 MiB, under every gen's
    # default scoped VMEM limit, and gives v7x >=2 "parallel" steps to shard).
    bm = B if B <= 256 else 256
    num_b_tiles = pl.cdiv(B, bm)

    grid = (num_b_tiles,)

    cost = pl.CostEstimate(
        flops=2 * B * K * N,
        transcendentals=0,
        # Weight (and bias) are re-streamed once per batch tile.
        bytes_accessed=4 * (B * K + num_b_tiles * (K * N + N) + B * N),
    )

    out = pl.pallas_call(
        _linear_kernel,
        out_shape=jax.ShapeDtypeStruct((B, N), jnp.float32),
        grid_spec=pltpu.PrefetchScalarGridSpec(
            num_scalar_prefetch=0,
            grid=grid,
            in_specs=[
                pl.BlockSpec((bm, K), lambda i: (i, 0)),   # x tile (full K, one step)
                pl.BlockSpec((N, K), lambda i: (0, 0)),    # full weight, lane-dense
                pl.BlockSpec((1, N), lambda i: (0, 0)),    # bias (tiny, resident)
            ],
            out_specs=pl.BlockSpec((bm, N), lambda i: (i, 0)),
        ),
        compiler_params=pltpu.CompilerParams(
            dimension_semantics=("parallel",)),
        cost_estimate=cost,
    )(x_flat, weight, b2d)
    return out


if __name__ == "__main__":
    # Module constants from the PyTorch script.
    C, H, W = 3, 64, 64
    input_size = C * H * W          # 3 * 64 * 64 = 12288
    num_classes = 3
    batch = 2

    key = jax.random.PRNGKey(0)
    kx, kw, kb = jax.random.split(key, 3)

    # Deterministic parameter init mimicking nn.Linear's default
    # uniform(-1/sqrt(in_features), 1/sqrt(in_features)).
    bound = 1.0 / (input_size ** 0.5)
    weight = jax.random.uniform(kw, (num_classes, input_size),
                                minval=-bound, maxval=bound, dtype=jnp.float32)
    bias = jax.random.uniform(kb, (num_classes,),
                              minval=-bound, maxval=bound, dtype=jnp.float32)

    x = jax.random.normal(kx, (batch, C, H, W), dtype=jnp.float32)

    out = simple_cnn_forward(x, weight, bias)
    out = jax.block_until_ready(out)

    # Reference check in plain JAX (same math).
    ref = x.reshape(batch, -1) @ weight.T + bias
    assert out.shape == (batch, num_classes)
    assert jnp.allclose(out, ref, atol=1e-3, rtol=1e-3)

    print("KERNEL_OK")
</pallas_src>

<mosaic_0001>
module attributes {stable_mosaic.version = 11 : i64} {
  func.func @_linear_kernel(%arg0: i32, %arg1: memref<2x12288xf32, #tpu.memory_space<vmem>>, %arg2: memref<3x12288xf32, #tpu.memory_space<vmem>>, %arg3: memref<1x3xf32, #tpu.memory_space<vmem>>, %arg4: memref<2x3xf32, #tpu.memory_space<vmem>>) attributes {dimension_semantics = [#tpu.dimension_semantics<parallel>], iteration_bounds = array<i64: 1>, scalar_prefetch = 0 : i64, scratch_operands = 0 : i64, tpu.core_type = #tpu.core_type<tc>, window_params = [{transform_indices = @transform_0, window_bounds = array<i64: 2, 12288>}, {pipeline_mode = #tpu.pipeline_mode<synchronous>, transform_indices = @transform_1, window_bounds = array<i64: 3, 12288>}, {pipeline_mode = #tpu.pipeline_mode<synchronous>, transform_indices = @transform_2, window_bounds = array<i64: 1, 3>}, {transform_indices = @transform_3, window_bounds = array<i64: 2, 3>}]} {
    %c0 = arith.constant 0 : index
    %c0_0 = arith.constant 0 : index
    %0 = vector.load %arg1[%c0, %c0_0] : memref<2x12288xf32, #tpu.memory_space<vmem>>, vector<2x12288xf32>
    %c0_1 = arith.constant 0 : index
    %c0_2 = arith.constant 0 : index
    %1 = vector.load %arg2[%c0_1, %c0_2] : memref<3x12288xf32, #tpu.memory_space<vmem>>, vector<3x12288xf32>
    %cst = arith.constant dense<0.000000e+00> : vector<2x3xf32>
    %2 = tpu.matmul %0, %1, %cst {dimension_numbers = #tpu.dot_dimension_numbers<[1], [1], [0], [0], [0, 0, 1, 0], [], []>} : vector<2x12288xf32>, vector<3x12288xf32>, vector<2x3xf32> -> vector<2x3xf32>
    %c0_3 = arith.constant 0 : index
    %c0_4 = arith.constant 0 : index
    %3 = vector.load %arg3[%c0_3, %c0_4] : memref<1x3xf32, #tpu.memory_space<vmem>>, vector<1x3xf32>
    %4 = vector.broadcast %3 : vector<1x3xf32> to vector<2x3xf32>
    %5 = arith.addf %2, %4 : vector<2x3xf32>
    %c0_5 = arith.constant 0 : index
    %c0_6 = arith.constant 0 : index
    %6 = vector.load %arg4[%c0_5, %c0_6] : memref<2x3xf32, #tpu.memory_space<vmem>>, vector<2x3xf32>
    tpu.vector_store %arg4[%c0_5, %c0_6], %5 {strides = array<i32>} : memref<2x3xf32, #tpu.memory_space<vmem>>, vector<2x3xf32>,
    return
  }
  func.func @transform_0(%arg0: i32) -> (i32, i32) {
    %c0_i32 = arith.constant 0 : i32
    %c0_i32_0 = arith.constant 0 : i32
    return %arg0, %c0_i32 : i32, i32
  }
  func.func @transform_1(%arg0: i32) -> (i32, i32) {
    %c0_i32 = arith.constant 0 : i32
    %c0_i32_0 = arith.constant 0 : i32
    %c0_i32_1 = arith.constant 0 : i32
    return %c0_i32, %c0_i32_0 : i32, i32
  }
  func.func @transform_2(%arg0: i32) -> (i32, i32) {
    %c0_i32 = arith.constant 0 : i32
    %c0_i32_0 = arith.constant 0 : i32
    %c0_i32_1 = arith.constant 0 : i32
    return %c0_i32, %c0_i32_0 : i32, i32
  }
  func.func @transform_3(%arg0: i32) -> (i32, i32) {
    %c0_i32 = arith.constant 0 : i32
    %c0_i32_0 = arith.constant 0 : i32
    return %arg0, %c0_i32 : i32, i32
  }
}

</mosaic_0001>

<llo_original>
// kernel: tpu_custom_call.1
$region0: #{tpu_custom_call.1}
  #allocation0 [shape = 'u32[]', space=smem, size = 0x4, offset = 0x4, fixed_abs, tag = 'smem constant byte address 0x4 - core index']
  #allocation1 [shape = 'u32[72,128]{1,0:T(1,128)}', space=vmem, size = 0x9000, scoped, tag = 'internal scratch']
  %s0 = inlined_call_operand.hbm [shape: f32[2,12288], index: 0, kind: input, shape index: {}]
  %s1 = inlined_call_operand.hbm [shape: f32[3,12288], index: 1, kind: input, shape index: {}]
  %s2 = inlined_call_operand.vmem [shape: f32[1,3], index: 2, kind: input, shape index: {}]
  %s3 = inlined_call_operand.hbm [shape: f32[2,3], index: 3, kind: output, shape index: {}]
  %s4 = sld [smem:[#allocation0]]
  $region30: #{tpu_custom_call.1} parent=0
    _
  %s6 = ssub.s32 1, %s4
  %s7 = scalar_select 0, %s6, %s4
  $region1: #{tpu_custom_call.1} parent=0
    #allocation2 [shape = 'u8[98304]{0}', space=vmem, size = 0x18000, scoped, tag = 'input window, operand 0, single buffered']
    #allocation3 [shape = 's32[1]{0}', space=sflag, size = 0x4, scoped, tag = 'scoped memory for tpu_custom_call.1']
    #allocation4 [shape = 's32[1]{0}', space=sflag, size = 0x4, scoped, tag = 'scoped memory for tpu_custom_call.1']
    #allocation5 [shape = 'u8[196608]{0}', space=vmem, size = 0x30000, scoped, tag = 'input window, operand 1, single buffered']
    #allocation6 [shape = 's32[1]{0}', space=sflag, size = 0x4, scoped, tag = 'scoped memory for tpu_custom_call.1']
    #allocation7 [shape = 'u8[1024]{0}', space=vmem, size = 0x400, scoped, tag = 'output window, operand 0, single buffered']
    %8 = vsyncpa [#allocation3], 0
    %9 = vsyncpa [#allocation6], 0
    %10 = vsyncpa [#allocation4], 0
    // Predicated region
    $region2: #{tpu_custom_call.1} parent=1 // pred_check
      _
    $region3: #{tpu_custom_call.1} parent=1 // pred_check_branch
      %12 = sbr.rel (0) target = $region5
    $region4: #{tpu_custom_call.1} parent=1 // pred_region
      %14 = vsyncadd [#allocation3], 0
      %s16 = sshll.u32 %s0, 4
      %s17 = int_to_ptr.hbm [resolvable:$true] %s16
      %s18 = sshll.u32 [#allocation2], 4
      %s19 = int_to_ptr.vmem [resolvable:$true] %s18
      %21 = dma.hbm_to_vmem [thread:$0]  %s17, 3072, %s19, [#allocation3]
    $region5: #{tpu_custom_call.1} parent=1 // pred_fallthru
      _
    // Predicated region
    $region6: #{tpu_custom_call.1} parent=1 // pred_check
      _
    $region7: #{tpu_custom_call.1} parent=1 // pred_check_branch
      %23 = sbr.rel (0) target = $region9
    $region8: #{tpu_custom_call.1} parent=1 // pred_region
      %25 = vsyncadd [#allocation6], 0
      %s27 = sshll.u32 %s1, 4
      %s28 = int_to_ptr.hbm [resolvable:$true] %s27
      %s29 = sshll.u32 [#allocation5], 4
      %s30 = int_to_ptr.vmem [resolvable:$true] %s29
      %32 = dma.hbm_to_vmem [thread:$0]  %s28, 6144, %s30, [#allocation6]
    $region9: #{tpu_custom_call.1} parent=1 // pred_fallthru
      _
    // Predicated region
    $region10: #{tpu_custom_call.1} parent=1 // pred_check
      _
    $region11: #{tpu_custom_call.1} parent=1 // pred_check_branch
      %34 = sbr.rel (0) target = $region13
    $region12: #{tpu_custom_call.1} parent=1 // pred_region
      _
    $region13: #{tpu_custom_call.1} parent=1 // pred_fallthru
      _
    // Predicated region
    $region14: #{tpu_custom_call.1} parent=1 // pred_check
      _
    $region15: #{tpu_custom_call.1} parent=1 // pred_check_branch
      %36 = sbr.rel (0) target = $region17
    $region16: #{tpu_custom_call.1} parent=1 // pred_region
      %38 = dma.done [#allocation3], 3072
    $region17: #{tpu_custom_call.1} parent=1 // pred_fallthru
      _
    // Predicated region
    $region18: #{tpu_custom_call.1} parent=1 // pred_check
      _
    $region19: #{tpu_custom_call.1} parent=1 // pred_check_branch
      %40 = sbr.rel (0) target = $region21
    $region20: #{tpu_custom_call.1} parent=1 // pred_region
      %42 = dma.done [#allocation6], 6144
    $region21: #{tpu_custom_call.1} parent=1 // pred_fallthru
      _
    %v43 = vld [vmem:[#allocation2] sm:$0xff]
    %v44 = vld [vmem:[#allocation2 + $0x8] sm:$0xff]
    %v45 = vld [vmem:[#allocation2 + $0x10] sm:$0xff]
    %v46 = vld [vmem:[#allocation2 + $0x18] sm:$0xff]
    %v47 = vld [vmem:[#allocation2 + $0x20] sm:$0xff]
    %v48 = vld [vmem:[#allocation2 + $0x28] sm:$0xff]
    %v49 = vld [vmem:[#allocation2 + $0x30] sm:$0xff]
    %v50 = vld [vmem:[#allocation2 + $0x38] sm:$0xff]
    %v51 = vld [vmem:[#allocation2 + $0x40] sm:$0xff]
    %v52 = vld [vmem:[#allocation2 + $0x48] sm:$0xff]
    %v53 = vld [vmem:[#allocation2 + $0x50] sm:$0xff]
    %v54 = vld [vmem:[#allocation2 + $0x58] sm:$0xff]
    %v55 = vld [vmem:[#allocation2 + $0x60] sm:$0xff]
    %v56 = vld [vmem:[#allocation2 + $0x68] sm:$0xff]
    %v57 = vld [vmem:[#allocation2 + $0x70] sm:$0xff]
    %v58 = vld [vmem:[#allocation2 + $0x78] sm:$0xff]
    %v59 = vld [vmem:[#allocation2 + $0x80] sm:$0xff]
    %v60 = vld [vmem:[#allocation2 + $0x88] sm:$0xff]
    %v61 = vld [vmem:[#allocation2 + $0x90] sm:$0xff]
    %v62 = vld [vmem:[#allocation2 + $0x98] sm:$0xff]
    %v63 = vld [vmem:[#allocation2 + $0xa0] sm:$0xff]
    %v64 = vld [vmem:[#allocation2 + $0xa8] sm:$0xff]
    %v65 = vld [vmem:[#allocation2 + $0xb0] sm:$0xff]
    %v66 = vld [vmem:[#allocation2 + $0xb8] sm:$0xff]
    %v67 = vld [vmem:[#allocation5] sm:$0x77]
    %v68 = vld [vmem:[#allocation5 + $0x8] sm:$0x77]
    %v69 = vld [vmem:[#allocation5 + $0x10] sm:$0x77]
    %v70 = vld [vmem:[#allocation5 + $0x18] sm:$0x77]
    %v71 = vld [vmem:[#allocation5 + $0x20] sm:$0x77]
    %v72 = vld [vmem:[#allocation5 + $0x28] sm:$0x77]
    %v73 = vld [vmem:[#allocation5 + $0x30] sm:$0x77]
    %v74 = vld [vmem:[#allocation5 + $0x38] sm:$0x77]
    %v75 = vld [vmem:[#allocation5 + $0x40] sm:$0x77]
    %v76 = vld [vmem:[#allocation5 + $0x48] sm:$0x77]
    %v77 = vld [vmem:[#allocation5 + $0x50] sm:$0x77]
    %v78 = vld [vmem:[#allocation5 + $0x58] sm:$0x77]
    %v79 = vld [vmem:[#allocation5 + $0x60] sm:$0x77]
    %v80 = vld [vmem:[#allocation5 + $0x68] sm:$0x77]
    %v81 = vld [vmem:[#allocation5 + $0x70] sm:$0x77]
    %v82 = vld [vmem:[#allocation5 + $0x78] sm:$0x77]
    %v83 = vld [vmem:[#allocation5 + $0x80] sm:$0x77]
    %v84 = vld [vmem:[#allocation5 + $0x88] sm:$0x77]
    %v85 = vld [vmem:[#allocation5 + $0x90] sm:$0x77]
    %v86 = vld [vmem:[#allocation5 + $0x98] sm:$0x77]
    %v87 = vld [vmem:[#allocation5 + $0xa0] sm:$0x77]
    %v88 = vld [vmem:[#allocation5 + $0xa8] sm:$0x77]
    %v89 = vld [vmem:[#allocation5 + $0xb0] sm:$0x77]
    %v90 = vld [vmem:[#allocation5 + $0xb8] sm:$0x77]
    %v91 = vld [vmem:[#allocation5 + $0xc0] sm:$0x77]
    %v92 = vld [vmem:[#allocation5 + $0xc8] sm:$0x77]
    %v93 = vld [vmem:[#allocation5 + $0xd0] sm:$0x77]
    %v94 = vld [vmem:[#allocation5 + $0xd8] sm:$0x77]
    %v95 = vld [vmem:[#allocation5 + $0xe0] sm:$0x77]
    %v96 = vld [vmem:[#allocation5 + $0xe8] sm:$0x77]
    %v97 = vld [vmem:[#allocation5 + $0xf0] sm:$0x77]
    %v98 = vld [vmem:[#allocation5 + $0xf8] sm:$0x77]
    %v99 = vld [vmem:[#allocation5 + $0x100] sm:$0x77]
    %v100 = vld [vmem:[#allocation5 + $0x108] sm:$0x77]
    %v101 = vld [vmem:[#allocation5 + $0x110] sm:$0x77]
    %v102 = vld [vmem:[#allocation5 + $0x118] sm:$0x77]
    %v103 = vld [vmem:[#allocation5 + $0x120] sm:$0x77]
    %v104 = vld [vmem:[#allocation5 + $0x128] sm:$0x77]
    %v105 = vld [vmem:[#allocation5 + $0x130] sm:$0x77]
    %v106 = vld [vmem:[#allocation5 + $0x138] sm:$0x77]
    %v107 = vld [vmem:[#allocation5 + $0x140] sm:$0x77]
    %v108 = vld [vmem:[#allocation5 + $0x148] sm:$0x77]
    %v109 = vld [vmem:[#allocation5 + $0x150] sm:$0x77]
    %v110 = vld [vmem:[#allocation5 + $0x158] sm:$0x77]
    %v111 = vld [vmem:[#allocation5 + $0x160] sm:$0x77]
    %v112 = vld [vmem:[#allocation5 + $0x168] sm:$0x77]
    %v113 = vld [vmem:[#allocation5 + $0x170] sm:$0x77]
    %v114 = vld [vmem:[#allocation5 + $0x178] sm:$0x77]
    %v115 = vld [vmem:[%s2] sm:$0x1]
    %v117 = vperm.slane %v115, 0
    %143 = vst [vmem:[#allocation1] ss:$4 sm:$0xff] %v43
    %s144 = scalar_lea.vmem [#allocation1], 32
    %145 = vst [vmem:[%s144] ss:$4 sm:$0xff] %v44
    %v146 = vld.sshfl [vmem:[#allocation1] sm:$0xff pattern:$0x73625140]
    %v147 = vld.sshfl [vmem:[#allocation1 + $0x8] sm:$0xff pattern:$0x73625140]
    %v148 = vld.sshfl [vmem:[#allocation1 + $0x10] sm:$0xff pattern:$0x73625140]
    %v149 = vld.sshfl [vmem:[#allocation1 + $0x18] sm:$0xff pattern:$0x73625140]
    %v150 = vld.sshfl [vmem:[#allocation1 + $0x20] sm:$0xff pattern:$0x73625140]
    %v151 = vld.sshfl [vmem:[#allocation1 + $0x28] sm:$0xff pattern:$0x73625140]
    %v152 = vld.sshfl [vmem:[#allocation1 + $0x30] sm:$0xff pattern:$0x73625140]
    %v153 = vld.sshfl [vmem:[#allocation1 + $0x38] sm:$0xff pattern:$0x73625140]
    %154 = vst [vmem:[#allocation1] ss:$4 sm:$0xff] %v45
    %155 = vst [vmem:[%s144] ss:$4 sm:$0xff] %v46
    %v156 = vld.sshfl [vmem:[#allocation1] sm:$0xff pattern:$0x73625140]
    %v157 = vld.sshfl [vmem:[#allocation1 + $0x8] sm:$0xff pattern:$0x73625140]
    %v158 = vld.sshfl [vmem:[#allocation1 + $0x10] sm:$0xff pattern:$0x73625140]
    %v159 = vld.sshfl [vmem:[#allocation1 + $0x18] sm:$0xff pattern:$0x73625140]
    %v160 = vld.sshfl [vmem:[#allocation1 + $0x20] sm:$0xff pattern:$0x73625140]
    %v161 = vld.sshfl [vmem:[#allocation1 + $0x28] sm:$0xff pattern:$0x73625140]
    %v162 = vld.sshfl [vmem:[#allocation1 + $0x30] sm:$0xff pattern:$0x73625140]
    %v163 = vld.sshfl [vmem:[#allocation1 + $0x38] sm:$0xff pattern:$0x73625140]
    %164 = vst [vmem:[#allocation1] ss:$4 sm:$0xff] %v47
    %165 = vst [vmem:[%s144] ss:$4 sm:$0xff] %v48
    %v166 = vld.sshfl [vmem:[#allocation1] sm:$0xff pattern:$0x73625140]
    %v167 = vld.sshfl [vmem:[#allocation1 + $0x8] sm:$0xff pattern:$0x73625140]
    %v168 = vld.sshfl [vmem:[#allocation1 + $0x10] sm:$0xff pattern:$0x73625140]
    %v169 = vld.sshfl [vmem:[#allocation1 + $0x18] sm:$0xff pattern:$0x73625140]
    %v170 = vld.sshfl [vmem:[#allocation1 + $0x20] sm:$0xff pattern:$0x73625140]
    %v171 = vld.sshfl [vmem:[#allocation1 + $0x28] sm:$0xff pattern:$0x73625140]
    %v172 = vld.sshfl [vmem:[#allocation1 + $0x30] sm:$0xff pattern:$0x73625140]
    %v173 = vld.sshfl [vmem:[#allocation1 + $0x38] sm:$0xff pattern:$0x73625140]
    %174 = vst [vmem:[#allocation1] ss:$4 sm:$0xff] %v49
    %175 = vst [vmem:[%s144] ss:$4 sm:$0xff] %v50
    %v176 = vld.sshfl [vmem:[#allocation1] sm:$0xff pattern:$0x73625140]
    %v177 = vld.sshfl [vmem:[#allocation1 + $0x8] sm:$0xff pattern:$0x73625140]
    %v178 = vld.sshfl [vmem:[#allocation1 + $0x10] sm:$0xff pattern:$0x73625140]
    %v179 = vld.sshfl [vmem:[#allocation1 + $0x18] sm:$0xff pattern:$0x73625140]
    %v180 = vld.sshfl [vmem:[#allocation1 + $0x20] sm:$0xff pattern:$0x73625140]
    %v181 = vld.sshfl [vmem:[#allocation1 + $0x28] sm:$0xff pattern:$0x73625140]
    %v182 = vld.sshfl [vmem:[#allocation1 + $0x30] sm:$0xff pattern:$0x73625140]
    %v183 = vld.sshfl [vmem:[#allocation1 + $0x38] sm:$0xff pattern:$0x73625140]
    %184 = vst [vmem:[#allocation1] ss:$4 sm:$0xff] %v51
    %185 = vst [vmem:[%s144] ss:$4 sm:$0xff] %v52
    %v186 = vld.sshfl [vmem:[#allocation1] sm:$0xff pattern:$0x73625140]
    %v187 = vld.sshfl [vmem:[#allocation1 + $0x8] sm:$0xff pattern:$0x73625140]
    %v188 = vld.sshfl [vmem:[#allocation1 + $0x10] sm:$0xff pattern:$0x73625140]
    %v189 = vld.sshfl [vmem:[#allocation1 + $0x18] sm:$0xff pattern:$0x73625140]
    %v190 = vld.sshfl [vmem:[#allocation1 + $0x20] sm:$0xff pattern:$0x73625140]
    %v191 = vld.sshfl [vmem:[#allocation1 + $0x28] sm:$0xff pattern:$0x73625140]
    %v192 = vld.sshfl [vmem:[#allocation1 + $0x30] sm:$0xff pattern:$0x73625140]
    %v193 = vld.sshfl [vmem:[#allocation1 + $0x38] sm:$0xff pattern:$0x73625140]
    %194 = vst [vmem:[#allocation1] ss:$4 sm:$0xff] %v53
    %195 = vst [vmem:[%s144] ss:$4 sm:$0xff] %v54
    %v196 = vld.sshfl [vmem:[#allocation1] sm:$0xff pattern:$0x73625140]
    %v197 = vld.sshfl [vmem:[#allocation1 + $0x8] sm:$0xff pattern:$0x73625140]
    %v198 = vld.sshfl [vmem:[#allocation1 + $0x10] sm:$0xff pattern:$0x73625140]
    %v199 = vld.sshfl [vmem:[#allocation1 + $0x18] sm:$0xff pattern:$0x73625140]
    %v200 = vld.sshfl [vmem:[#allocation1 + $0x20] sm:$0xff pattern:$0x73625140]
    %v201 = vld.sshfl [vmem:[#allocation1 + $0x28] sm:$0xff pattern:$0x73625140]
    %v202 = vld.sshfl [vmem:[#allocation1 + $0x30] sm:$0xff pattern:$0x73625140]
    %v203 = vld.sshfl [vmem:[#allocation1 + $0x38] sm:$0xff pattern:$0x73625140]
    %204 = vst [vmem:[#allocation1] ss:$4 sm:$0xff] %v55
    %205 = vst [vmem:[%s144] ss:$4 sm:$0xff] %v56
    %v206 = vld.sshfl [vmem:[#allocation1] sm:$0xff pattern:$0x73625140]
    %v207 = vld.sshfl [vmem:[#allocation1 + $0x8] sm:$0xff pattern:$0x73625140]
    %v208 = vld.sshfl [vmem:[#allocation1 + $0x10] sm:$0xff pattern:$0x73625140]
    %v209 = vld.sshfl [vmem:[#allocation1 + $0x18] sm:$0xff pattern:$0x73625140]
    %v210 = vld.sshfl [vmem:[#allocation1 + $0x20] sm:$0xff pattern:$0x73625140]
    %v211 = vld.sshfl [vmem:[#allocation1 + $0x28] sm:$0xff pattern:$0x73625140]
    %v212 = vld.sshfl [vmem:[#allocation1 + $0x30] sm:$0xff pattern:$0x73625140]
    %v213 = vld.sshfl [vmem:[#allocation1 + $0x38] sm:$0xff pattern:$0x73625140]
    %214 = vst [vmem:[#allocation1] ss:$4 sm:$0xff] %v57
    %215 = vst [vmem:[%s144] ss:$4 sm:$0xff] %v58
    %v216 = vld.sshfl [vmem:[#allocation1] sm:$0xff pattern:$0x73625140]
    %v217 = vld.sshfl [vmem:[#allocation1 + $0x8] sm:$0xff pattern:$0x73625140]
    %v218 = vld.sshfl [vmem:[#allocation1 + $0x10] sm:$0xff pattern:$0x73625140]
    %v219 = vld.sshfl [vmem:[#allocation1 + $0x18] sm:$0xff pattern:$0x73625140]
    %v220 = vld.sshfl [vmem:[#allocation1 + $0x20] sm:$0xff pattern:$0x73625140]
    %v221 = vld.sshfl [vmem:[#allocation1 + $0x28] sm:$0xff pattern:$0x73625140]
    %v222 = vld.sshfl [vmem:[#allocation1 + $0x30] sm:$0xff pattern:$0x73625140]
    %v223 = vld.sshfl [vmem:[#allocation1 + $0x38] sm:$0xff pattern:$0x73625140]
    %224 = vst [vmem:[#allocation1] ss:$4 sm:$0xff] %v59
    %225 = vst [vmem:[%s144] ss:$4 sm:$0xff] %v60
    %v226 = vld.sshfl [vmem:[#allocation1] sm:$0xff pattern:$0x73625140]
    %v227 = vld.sshfl [vmem:[#allocation1 + $0x8] sm:$0xff pattern:$0x73625140]
    %v228 = vld.sshfl [vmem:[#allocation1 + $0x10] sm:$0xff pattern:$0x73625140]
    %v229 = vld.sshfl [vmem:[#allocation1 + $0x18] sm:$0xff pattern:$0x73625140]
    %v230 = vld.sshfl [vmem:[#allocation1 + $0x20] sm:$0xff pattern:$0x73625140]
    %v231 = vld.sshfl [vmem:[#allocation1 + $0x28] sm:$0xff pattern:$0x73625140]
    %v232 = vld.sshfl [vmem:[#allocation1 + $0x30] sm:$0xff pattern:$0x73625140]
    %v233 = vld.sshfl [vmem:[#allocation1 + $0x38] sm:$0xff pattern:$0x73625140]
    %234 = vst [vmem:[#allocation1] ss:$4 sm:$0xff] %v61
    %235 = vst [vmem:[%s144] ss:$4 sm:$0xff] %v62
    %v236 = vld.sshfl [vmem:[#allocation1] sm:$0xff pattern:$0x73625140]
    %v237 = vld.sshfl [vmem:[#allocation1 + $0x8] sm:$0xff pattern:$0x73625140]
    %v238 = vld.sshfl [vmem:[#allocation1 + $0x10] sm:$0xff pattern:$0x73625140]
    %v239 = vld.sshfl [vmem:[#allocation1 + $0x18] sm:$0xff pattern:$0x73625140]
    %v240 = vld.sshfl [vmem:[#allocation1 + $0x20] sm:$0xff pattern:$0x73625140]
    %v241 = vld.sshfl [vmem:[#allocation1 + $0x28] sm:$0xff pattern:$0x73625140]
    %v242 = vld.sshfl [vmem:[#allocation1 + $0x30] sm:$0xff pattern:$0x73625140]
    %v243 = vld.sshfl [vmem:[#allocation1 + $0x38] sm:$0xff pattern:$0x73625140]
    %244 = vst [vmem:[#allocation1] ss:$4 sm:$0xff] %v63
    %245 = vst [vmem:[%s144] ss:$4 sm:$0xff] %v64
    %v246 = vld.sshfl [vmem:[#allocation1] sm:$0xff pattern:$0x73625140]
    %v247 = vld.sshfl [vmem:[#allocation1 + $0x8] sm:$0xff pattern:$0x73625140]
    %v248 = vld.sshfl [vmem:[#allocation1 + $0x10] sm:$0xff pattern:$0x73625140]
    %v249 = vld.sshfl [vmem:[#allocation1 + $0x18] sm:$0xff pattern:$0x73625140]
    %v250 = vld.sshfl [vmem:[#allocation1 + $0x20] sm:$0xff pattern:$0x73625140]
    %v251 = vld.sshfl [vmem:[#allocation1 + $0x28] sm:$0xff pattern:$0x73625140]
    %v252 = vld.sshfl [vmem:[#allocation1 + $0x30] sm:$0xff pattern:$0x73625140]
    %v253 = vld.sshfl [vmem:[#allocation1 + $0x38] sm:$0xff pattern:$0x73625140]
    %254 = vst [vmem:[#allocation1] ss:$4 sm:$0xff] %v65
    %255 = vst [vmem:[%s144] ss:$4 sm:$0xff] %v66
    %v256 = vld.sshfl [vmem:[#allocation1] sm:$0xff pattern:$0x73625140]
    %v257 = vld.sshfl [vmem:[#allocation1 + $0x8] sm:$0xff pattern:$0x73625140]
    %v258 = vld.sshfl [vmem:[#allocation1 + $0x10] sm:$0xff pattern:$0x73625140]
    %v259 = vld.sshfl [vmem:[#allocation1 + $0x18] sm:$0xff pattern:$0x73625140]
    %v260 = vld.sshfl [vmem:[#allocation1 + $0x20] sm:$0xff pattern:$0x73625140]
    %v261 = vld.sshfl [vmem:[#allocation1 + $0x28] sm:$0xff pattern:$0x73625140]
    %v262 = vld.sshfl [vmem:[#allocation1 + $0x30] sm:$0xff pattern:$0x73625140]
    %v263 = vld.sshfl [vmem:[#allocation1 + $0x38] sm:$0xff pattern:$0x73625140]
    %408 = vst [vmem:[#allocation1] ss:$2 sm:$0xff] %v67
    %s409 = scalar_lea.vmem [#allocation1], 16
    %410 = vst [vmem:[%s409] ss:$2 sm:$0xff] %v68
    %s411 = scalar_lea.vmem [#allocation1], 32
    %412 = vst [vmem:[%s411] ss:$2 sm:$0xff] %v69
    %s413 = scalar_lea.vmem [#allocation1], 48
    %414 = vst [vmem:[%s413] ss:$2 sm:$0xff] %v70
    %v415 = vld.sshfl [vmem:[#allocation1] sm:$0xff pattern:$0x75316420]
    %v416 = vld.sshfl [vmem:[#allocation1 + $0x8] sm:$0xff pattern:$0x75316420]
    %v417 = vld.sshfl [vmem:[#allocation1 + $0x10] sm:$0xff pattern:$0x75316420]
    %v418 = vld.sshfl [vmem:[#allocation1 + $0x18] sm:$0xff pattern:$0x75316420]
    %v419 = vld.sshfl [vmem:[#allocation1 + $0x20] sm:$0xff pattern:$0x75316420]
    %v420 = vld.sshfl [vmem:[#allocation1 + $0x28] sm:$0xff pattern:$0x75316420]
    %v421 = vld.sshfl [vmem:[#allocation1 + $0x30] sm:$0xff pattern:$0x75316420]
    %v422 = vld.sshfl [vmem:[#allocation1 + $0x38] sm:$0xff pattern:$0x75316420]
    %423 = vst [vmem:[#allocation1] ss:$2 sm:$0xff] %v71
    %424 = vst [vmem:[%s409] ss:$2 sm:$0xff] %v72
    %425 = vst [vmem:[%s411] ss:$2 sm:$0xff] %v73
    %426 = vst [vmem:[%s413] ss:$2 sm:$0xff] %v74
    %v427 = vld.sshfl [vmem:[#allocation1] sm:$0xff pattern:$0x75316420]
    %v428 = vld.sshfl [vmem:[#allocation1 + $0x8] sm:$0xff pattern:$0x75316420]
    %v429 = vld.sshfl [vmem:[#allocation1 + $0x10] sm:$0xff pattern:$0x75316420]
    %v430 = vld.sshfl [vmem:[#allocation1 + $0x18] sm:$0xff pattern:$0x75316420]
    %v431 = vld.sshfl [vmem:[#allocation1 + $0x20] sm:$0xff pattern:$0x75316420]
    %v432 = vld.sshfl [vmem:[#allocation1 + $0x28] sm:$0xff pattern:$0x75316420]
    %v433 = vld.sshfl [vmem:[#allocation1 + $0x30] sm:$0xff pattern:$0x75316420]
    %v434 = vld.sshfl [vmem:[#allocation1 + $0x38] sm:$0xff pattern:$0x75316420]
    %435 = vst [vmem:[#allocation1] ss:$2 sm:$0xff] %v75
    %436 = vst [vmem:[%s409] ss:$2 sm:$0xff] %v76
    %437 = vst [vmem:[%s411] ss:$2 sm:$0xff] %v77
    %438 = vst [vmem:[%s413] ss:$2 sm:$0xff] %v78
    %v439 = vld.sshfl [vmem:[#allocation1] sm:$0xff pattern:$0x75316420]
    %v440 = vld.sshfl [vmem:[#allocation1 + $0x8] sm:$0xff pattern:$0x75316420]
    %v441 = vld.sshfl [vmem:[#allocation1 + $0x10] sm:$0xff pattern:$0x75316420]
    %v442 = vld.sshfl [vmem:[#allocation1 + $0x18] sm:$0xff pattern:$0x75316420]
    %v443 = vld.sshfl [vmem:[#allocation1 + $0x20] sm:$0xff pattern:$0x75316420]
    %v444 = vld.sshfl [vmem:[#allocation1 + $0x28] sm:$0xff pattern:$0x75316420]
    %v445 = vld.sshfl [vmem:[#allocation1 + $0x30] sm:$0xff pattern:$0x75316420]
    %v446 = vld.sshfl [vmem:[#allocation1 + $0x38] sm:$0xff pattern:$0x75316420]
    %447 = vst [vmem:[#allocation1] ss:$2 sm:$0xff] %v79
    %448 = vst [vmem:[%s409] ss:$2 sm:$0xff] %v80
    %449 = vst [vmem:[%s411] ss:$2 sm:$0xff] %v81
    %450 = vst [vmem:[%s413] ss:$2 sm:$0xff] %v82
    %v451 = vld.sshfl [vmem:[#allocation1] sm:$0xff pattern:$0x75316420]
    %v452 = vld.sshfl [vmem:[#allocation1 + $0x8] sm:$0xff pattern:$0x75316420]
    %v453 = vld.sshfl [vmem:[#allocation1 + $0x10] sm:$0xff pattern:$0x75316420]
    %v454 = vld.sshfl [vmem:[#allocation1 + $0x18] sm:$0xff pattern:$0x75316420]
    %v455 = vld.sshfl [vmem:[#allocation1 + $0x20] sm:$0xff pattern:$0x75316420]
    %v456 = vld.sshfl [vmem:[#allocation1 + $0x28] sm:$0xff pattern:$0x75316420]
    %v457 = vld.sshfl [vmem:[#allocation1 + $0x30] sm:$0xff pattern:$0x75316420]
    %v458 = vld.sshfl [vmem:[#allocation1 + $0x38] sm:$0xff pattern:$0x75316420]
    %459 = vst [vmem:[#allocation1] ss:$2 sm:$0xff] %v83
    %460 = vst [vmem:[%s409] ss:$2 sm:$0xff] %v84
    %461 = vst [vmem:[%s411] ss:$2 sm:$0xff] %v85
    %462 = vst [vmem:[%s413] ss:$2 sm:$0xff] %v86
    %v463 = vld.sshfl [vmem:[#allocation1] sm:$0xff pattern:$0x75316420]
    %v464 = vld.sshfl [vmem:[#allocation1 + $0x8] sm:$0xff pattern:$0x75316420]
    %v465 = vld.sshfl [vmem:[#allocation1 + $0x10] sm:$0xff pattern:$0x75316420]
    %v466 = vld.sshfl [vmem:[#allocation1 + $0x18] sm:$0xff pattern:$0x75316420]
    %v467 = vld.sshfl [vmem:[#allocation1 + $0x20] sm:$0xff pattern:$0x75316420]
    %v468 = vld.sshfl [vmem:[#allocation1 + $0x28] sm:$0xff pattern:$0x75316420]
    %v469 = vld.sshfl [vmem:[#allocation1 + $0x30] sm:$0xff pattern:$0x75316420]
    %v470 = vld.sshfl [vmem:[#allocation1 + $0x38] sm:$0xff pattern:$0x75316420]
    %471 = vst [vmem:[#allocation1] ss:$2 sm:$0xff] %v87
    %472 = vst [vmem:[%s409] ss:$2 sm:$0xff] %v88
    %473 = vst [vmem:[%s411] ss:$2 sm:$0xff] %v89
    %474 = vst [vmem:[%s413] ss:$2 sm:$0xff] %v90
    %v475 = vld.sshfl [vmem:[#allocation1] sm:$0xff pattern:$0x75316420]
    %v476 = vld.sshfl [vmem:[#allocation1 + $0x8] sm:$0xff pattern:$0x75316420]
    %v477 = vld.sshfl [vmem:[#allocation1 + $0x10] sm:$0xff pattern:$0x75316420]
    %v478 = vld.sshfl [vmem:[#allocation1 + $0x18] sm:$0xff pattern:$0x75316420]
    %v479 = vld.sshfl [vmem:[#allocation1 + $0x20] sm:$0xff pattern:$0x75316420]
    %v480 = vld.sshfl [vmem:[#allocation1 + $0x28] sm:$0xff pattern:$0x75316420]
    %v481 = vld.sshfl [vmem:[#allocation1 + $0x30] sm:$0xff pattern:$0x75316420]
    %v482 = vld.sshfl [vmem:[#allocation1 + $0x38] sm:$0xff pattern:$0x75316420]
    %483 = vst [vmem:[#allocation1] ss:$2 sm:$0xff] %v91
    %484 = vst [vmem:[%s409] ss:$2 sm:$0xff] %v92
    %485 = vst [vmem:[%s411] ss:$2 sm:$0xff] %v93
    %486 = vst [vmem:[%s413] ss:$2 sm:$0xff] %v94
    %v487 = vld.sshfl [vmem:[#allocation1] sm:$0xff pattern:$0x75316420]
    %v488 = vld.sshfl [vmem:[#allocation1 + $0x8] sm:$0xff pattern:$0x75316420]
    %v489 = vld.sshfl [vmem:[#allocation1 + $0x10] sm:$0xff pattern:$0x75316420]
    %v490 = vld.sshfl [vmem:[#allocation1 + $0x18] sm:$0xff pattern:$0x75316420]
    %v491 = vld.sshfl [vmem:[#allocation1 + $0x20] sm:$0xff pattern:$0x75316420]
    %v492 = vld.sshfl [vmem:[#allocation1 + $0x28] sm:$0xff pattern:$0x75316420]
    %v493 = vld.sshfl [vmem:[#allocation1 + $0x30] sm:$0xff pattern:$0x75316420]
    %v494 = vld.sshfl [vmem:[#allocation1 + $0x38] sm:$0xff pattern:$0x75316420]
    %495 = vst [vmem:[#allocation1] ss:$2 sm:$0xff] %v95
    %496 = vst [vmem:[%s409] ss:$2 sm:$0xff] %v96
    %497 = vst [vmem:[%s411] ss:$2 sm:$0xff] %v97
    %498 = vst [vmem:[%s413] ss:$2 sm:$0xff] %v98
    %v499 = vld.sshfl [vmem:[#allocation1] sm:$0xff pattern:$0x75316420]
    %v500 = vld.sshfl [vmem:[#allocation1 + $0x8] sm:$0xff pattern:$0x75316420]
    %v501 = vld.sshfl [vmem:[#allocation1 + $0x10] sm:$0xff pattern:$0x75316420]
    %v502 = vld.sshfl [vmem:[#allocation1 + $0x18] sm:$0xff pattern:$0x75316420]
    %v503 = vld.sshfl [vmem:[#allocation1 + $0x20] sm:$0xff pattern:$0x75316420]
    %v504 = vld.sshfl [vmem:[#allocation1 + $0x28] sm:$0xff pattern:$0x75316420]
    %v505 = vld.sshfl [vmem:[#allocation1 + $0x30] sm:$0xff pattern:$0x75316420]
    %v506 = vld.sshfl [vmem:[#allocation1 + $0x38] sm:$0xff pattern:$0x75316420]
    %507 = vst [vmem:[#allocation1] ss:$2 sm:$0xff] %v99
    %508 = vst [vmem:[%s409] ss:$2 sm:$0xff] %v100
    %509 = vst [vmem:[%s411] ss:$2 sm:$0xff] %v101
    %510 = vst [vmem:[%s413] ss:$2 sm:$0xff] %v102
    %v511 = vld.sshfl [vmem:[#allocation1] sm:$0xff pattern:$0x75316420]
    %v512 = vld.sshfl [vmem:[#allocation1 + $0x8] sm:$0xff pattern:$0x75316420]
    %v513 = vld.sshfl [vmem:[#allocation1 + $0x10] sm:$0xff pattern:$0x75316420]
    %v514 = vld.sshfl [vmem:[#allocation1 + $0x18] sm:$0xff pattern:$0x75316420]
    %v515 = vld.sshfl [vmem:[#allocation1 + $0x20] sm:$0xff pattern:$0x75316420]
    %v516 = vld.sshfl [vmem:[#allocation1 + $0x28] sm:$0xff pattern:$0x75316420]
    %v517 = vld.sshfl [vmem:[#allocation1 + $0x30] sm:$0xff pattern:$0x75316420]
    %v518 = vld.sshfl [vmem:[#allocation1 + $0x38] sm:$0xff pattern:$0x75316420]
    %519 = vst [vmem:[#allocation1] ss:$2 sm:$0xff] %v103
    %520 = vst [vmem:[%s409] ss:$2 sm:$0xff] %v104
    %521 = vst [vmem:[%s411] ss:$2 sm:$0xff] %v105
    %522 = vst [vmem:[%s413] ss:$2 sm:$0xff] %v106
    %v523 = vld.sshfl [vmem:[#allocation1] sm:$0xff pattern:$0x75316420]
    %v524 = vld.sshfl [vmem:[#allocation1 + $0x8] sm:$0xff pattern:$0x75316420]
    %v525 = vld.sshfl [vmem:[#allocation1 + $0x10] sm:$0xff pattern:$0x75316420]
    %v526 = vld.sshfl [vmem:[#allocation1 + $0x18] sm:$0xff pattern:$0x75316420]
    %v527 = vld.sshfl [vmem:[#allocation1 + $0x20] sm:$0xff pattern:$0x75316420]
    %v528 = vld.sshfl [vmem:[#allocation1 + $0x28] sm:$0xff pattern:$0x75316420]
    %v529 = vld.sshfl [vmem:[#allocation1 + $0x30] sm:$0xff pattern:$0x75316420]
    %v530 = vld.sshfl [vmem:[#allocation1 + $0x38] sm:$0xff pattern:$0x75316420]
    %531 = vst [vmem:[#allocation1] ss:$2 sm:$0xff] %v107
    %532 = vst [vmem:[%s409] ss:$2 sm:$0xff] %v108
    %533 = vst [vmem:[%s411] ss:$2 sm:$0xff] %v109
    %534 = vst [vmem:[%s413] ss:$2 sm:$0xff] %v110
    %v535 = vld.sshfl [vmem:[#allocation1] sm:$0xff pattern:$0x75316420]
    %v536 = vld.sshfl [vmem:[#allocation1 + $0x8] sm:$0xff pattern:$0x75316420]
    %v537 = vld.sshfl [vmem:[#allocation1 + $0x10] sm:$0xff pattern:$0x75316420]
    %v538 = vld.sshfl [vmem:[#allocation1 + $0x18] sm:$0xff pattern:$0x75316420]
    %v539 = vld.sshfl [vmem:[#allocation1 + $0x20] sm:$0xff pattern:$0x75316420]
    %v540 = vld.sshfl [vmem:[#allocation1 + $0x28] sm:$0xff pattern:$0x75316420]
    %v541 = vld.sshfl [vmem:[#allocation1 + $0x30] sm:$0xff pattern:$0x75316420]
    %v542 = vld.sshfl [vmem:[#allocation1 + $0x38] sm:$0xff pattern:$0x75316420]
    %543 = vst [vmem:[#allocation1] ss:$2 sm:$0xff] %v111
    %544 = vst [vmem:[%s409] ss:$2 sm:$0xff] %v112
    %545 = vst [vmem:[%s411] ss:$2 sm:$0xff] %v113
    %546 = vst [vmem:[%s413] ss:$2 sm:$0xff] %v114
    %v547 = vld.sshfl [vmem:[#allocation1] sm:$0xff pattern:$0x75316420]
    %v548 = vld.sshfl [vmem:[#allocation1 + $0x8] sm:$0xff pattern:$0x75316420]
    %v549 = vld.sshfl [vmem:[#allocation1 + $0x10] sm:$0xff pattern:$0x75316420]
    %v550 = vld.sshfl [vmem:[#allocation1 + $0x18] sm:$0xff pattern:$0x75316420]
    %v551 = vld.sshfl [vmem:[#allocation1 + $0x20] sm:$0xff pattern:$0x75316420]
    %v552 = vld.sshfl [vmem:[#allocation1 + $0x28] sm:$0xff pattern:$0x75316420]
    %v553 = vld.sshfl [vmem:[#allocation1 + $0x30] sm:$0xff pattern:$0x75316420]
    %v554 = vld.sshfl [vmem:[#allocation1 + $0x38] sm:$0xff pattern:$0x75316420]
    %651 = vmatpush.xpose.msra.mxu0 0.0
    %652 = vmatpush.xpose.msra.mxu0 0.0
    %653 = vmatpush.xpose.msra.mxu0 0.0
    %654 = vmatpush.xpose.msra.mxu0 0.0
    %655 = vmatpush.xpose.msra.mxu0 0.0
    %656 = vmatpush.xpose.msra.mxu0 0.0
    %657 = vmatpush.xpose.msra.mxu0 0.0
    %658 = vmatpush.xpose.msra.mxu0 0.0
    %659 = vmatpush.xpose.msra.mxu0 0.0
    %660 = vmatpush.xpose.msra.mxu0 0.0
    %661 = vmatpush.xpose.msra.mxu0 0.0
    %662 = vmatpush.xpose.msra.mxu0 0.0
    %663 = vmatpush.xpose.msra.mxu0 0.0
    %664 = vmatpush.xpose.msra.mxu0 0.0
    %665 = vmatpush.xpose.msra.mxu0 0.0
    %666 = vmatpush.xpose.msra.mxu0 %v415
    %667 = vmatmul.f32.gmra.mxu0 %v146
    %v668 = vpop.f32.mrf.mxu0
    %v669 = vadd.f32 %v117, %v668
    %670 = vdwg.mxu0
    %671 = vmatpush.xpose.msra.mxu0 0.0
    %672 = vmatpush.xpose.msra.mxu0 0.0
    %673 = vmatpush.xpose.msra.mxu0 0.0
    %674 = vmatpush.xpose.msra.mxu0 0.0
    %675 = vmatpush.xpose.msra.mxu0 0.0
    %676 = vmatpush.xpose.msra.mxu0 0.0
    %677 = vmatpush.xpose.msra.mxu0 0.0
    %678 = vmatpush.xpose.msra.mxu0 0.0
    %679 = vmatpush.xpose.msra.mxu0 0.0
    %680 = vmatpush.xpose.msra.mxu0 0.0
    %681 = vmatpush.xpose.msra.mxu0 0.0
    %682 = vmatpush.xpose.msra.mxu0 0.0
    %683 = vmatpush.xpose.msra.mxu0 0.0
    %684 = vmatpush.xpose.msra.mxu0 0.0
    %685 = vmatpush.xpose.msra.mxu0 0.0
    %686 = vmatpush.xpose.msra.mxu0 %v416
    %687 = vmatmul.f32.gmra.mxu0 %v147
    %v688 = vpop.f32.mrf.mxu0
    %v689 = vadd.f32 %v669, %v688
    %690 = vdwg.mxu0
    %691 = vmatpush.xpose.msra.mxu0 0.0
    %692 = vmatpush.xpose.msra.mxu0 0.0
    %693 = vmatpush.xpose.msra.mxu0 0.0
    %694 = vmatpush.xpose.msra.mxu0 0.0
    %695 = vmatpush.xpose.msra.mxu0 0.0
    %696 = vmatpush.xpose.msra.mxu0 0.0
    %697 = vmatpush.xpose.msra.mxu0 0.0
    %698 = vmatpush.xpose.msra.mxu0 0.0
    %699 = vmatpush.xpose.msra.mxu0 0.0
    %700 = vmatpush.xpose.msra.mxu0 0.0
    %701 = vmatpush.xpose.msra.mxu0 0.0
    %702 = vmatpush.xpose.msra.mxu0 0.0
    %703 = vmatpush.xpose.msra.mxu0 0.0
    %704 = vmatpush.xpose.msra.mxu0 0.0
    %705 = vmatpush.xpose.msra.mxu0 0.0
    %706 = vmatpush.xpose.msra.mxu0 %v417
    %707 = vmatmul.f32.gmra.mxu0 %v148
    %v708 = vpop.f32.mrf.mxu0
    %v709 = vadd.f32 %v689, %v708
    %710 = vdwg.mxu0
    %711 = vmatpush.xpose.msra.mxu0 0.0
    %712 = vmatpush.xpose.msra.mxu0 0.0
    %713 = vmatpush.xpose.msra.mxu0 0.0
    %714 = vmatpush.xpose.msra.mxu0 0.0
    %715 = vmatpush.xpose.msra.mxu0 0.0
    %716 = vmatpush.xpose.msra.mxu0 0.0
    %717 = vmatpush.xpose.msra.mxu0 0.0
    %718 = vmatpush.xpose.msra.mxu0 0.0
    %719 = vmatpush.xpose.msra.mxu0 0.0
    %720 = vmatpush.xpose.msra.mxu0 0.0
    %721 = vmatpush.xpose.msra.mxu0 0.0
    %722 = vmatpush.xpose.msra.mxu0 0.0
    %723 = vmatpush.xpose.msra.mxu0 0.0
    %724 = vmatpush.xpose.msra.mxu0 0.0
    %725 = vmatpush.xpose.msra.mxu0 0.0
    %726 = vmatpush.xpose.msra.mxu0 %v418
    %727 = vmatmul.f32.gmra.mxu0 %v149
    %v728 = vpop.f32.mrf.mxu0
    %v729 = vadd.f32 %v709, %v728
    %730 = vdwg.mxu0
    %731 = vmatpush.xpose.msra.mxu0 0.0
    %732 = vmatpush.xpose.msra.mxu0 0.0
    %733 = vmatpush.xpose.msra.mxu0 0.0
    %734 = vmatpush.xpose.msra.mxu0 0.0
    %735 = vmatpush.xpose.msra.mxu0 0.0
    %736 = vmatpush.xpose.msra.mxu0 0.0
    %737 = vmatpush.xpose.msra.mxu0 0.0
    %738 = vmatpush.xpose.msra.mxu0 0.0
    %739 = vmatpush.xpose.msra.mxu0 0.0
    %740 = vmatpush.xpose.msra.mxu0 0.0
    %741 = vmatpush.xpose.msra.mxu0 0.0
    %742 = vmatpush.xpose.msra.mxu0 0.0
    %743 = vmatpush.xpose.msra.mxu0 0.0
    %744 = vmatpush.xpose.msra.mxu0 0.0
    %745 = vmatpush.xpose.msra.mxu0 0.0
    %746 = vmatpush.xpose.msra.mxu0 %v419
    %747 = vmatmul.f32.gmra.mxu0 %v150
    %v748 = vpop.f32.mrf.mxu0
    %v749 = vadd.f32 %v729, %v748
    %750 = vdwg.mxu0
    %751 = vmatpush.xpose.msra.mxu0 0.0
    %752 = vmatpush.xpose.msra.mxu0 0.0
    %753 = vmatpush.xpose.msra.mxu0 0.0
    %754 = vmatpush.xpose.msra.mxu0 0.0
    %755 = vmatpush.xpose.msra.mxu0 0.0
    %756 = vmatpush.xpose.msra.mxu0 0.0
    %757 = vmatpush.xpose.msra.mxu0 0.0
    %758 = vmatpush.xpose.msra.mxu0 0.0
    %759 = vmatpush.xpose.msra.mxu0 0.0
    %760 = vmatpush.xpose.msra.mxu0 0.0
    %761 = vmatpush.xpose.msra.mxu0 0.0
    %762 = vmatpush.xpose.msra.mxu0 0.0
    %763 = vmatpush.xpose.msra.mxu0 0.0
    %764 = vmatpush.xpose.msra.mxu0 0.0
    %765 = vmatpush.xpose.msra.mxu0 0.0
    %766 = vmatpush.xpose.msra.mxu0 %v420
    %767 = vmatmul.f32.gmra.mxu0 %v151
    %v768 = vpop.f32.mrf.mxu0
    %v769 = vadd.f32 %v749, %v768
    %770 = vdwg.mxu0
    %771 = vmatpush.xpose.msra.mxu0 0.0
    %772 = vmatpush.xpose.msra.mxu0 0.0
    %773 = vmatpush.xpose.msra.mxu0 0.0
    %774 = vmatpush.xpose.msra.mxu0 0.0
    %775 = vmatpush.xpose.msra.mxu0 0.0
    %776 = vmatpush.xpose.msra.mxu0 0.0
    %777 = vmatpush.xpose.msra.mxu0 0.0
    %778 = vmatpush.xpose.msra.mxu0 0.0
    %779 = vmatpush.xpose.msra.mxu0 0.0
    %780 = vmatpush.xpose.msra.mxu0 0.0
    %781 = vmatpush.xpose.msra.mxu0 0.0
    %782 = vmatpush.xpose.msra.mxu0 0.0
    %783 = vmatpush.xpose.msra.mxu0 0.0
    %784 = vmatpush.xpose.msra.mxu0 0.0
    %785 = vmatpush.xpose.msra.mxu0 0.0
    %786 = vmatpush.xpose.msra.mxu0 %v421
    %787 = vmatmul.f32.gmra.mxu0 %v152
    %v788 = vpop.f32.mrf.mxu0
    %v789 = vadd.f32 %v769, %v788
    %790 = vdwg.mxu0
    %791 = vmatpush.xpose.msra.mxu0 0.0
    %792 = vmatpush.xpose.msra.mxu0 0.0
    %793 = vmatpush.xpose.msra.mxu0 0.0
    %794 = vmatpush.xpose.msra.mxu0 0.0
    %795 = vmatpush.xpose.msra.mxu0 0.0
    %796 = vmatpush.xpose.msra.mxu0 0.0
    %797 = vmatpush.xpose.msra.mxu0 0.0
    %798 = vmatpush.xpose.msra.mxu0 0.0
    %799 = vmatpush.xpose.msra.mxu0 0.0
    %800 = vmatpush.xpose.msra.mxu0 0.0
    %801 = vmatpush.xpose.msra.mxu0 0.0
    %802 = vmatpush.xpose.msra.mxu0 0.0
    %803 = vmatpush.xpose.msra.mxu0 0.0
    %804 = vmatpush.xpose.msra.mxu0 0.0
    %805 = vmatpush.xpose.msra.mxu0 0.0
    %806 = vmatpush.xpose.msra.mxu0 %v422
    %807 = vmatmul.f32.gmra.mxu0 %v153
    %v808 = vpop.f32.mrf.mxu0
    %v809 = vadd.f32 %v789, %v808
    %810 = vdwg.mxu0
    %811 = vmatpush.xpose.msra.mxu0 0.0
    %812 = vmatpush.xpose.msra.mxu0 0.0
    %813 = vmatpush.xpose.msra.mxu0 0.0
    %814 = vmatpush.xpose.msra.mxu0 0.0
    %815 = vmatpush.xpose.msra.mxu0 0.0
    %816 = vmatpush.xpose.msra.mxu0 0.0
    %817 = vmatpush.xpose.msra.mxu0 0.0
    %818 = vmatpush.xpose.msra.mxu0 0.0
    %819 = vmatpush.xpose.msra.mxu0 0.0
    %820 = vmatpush.xpose.msra.mxu0 0.0
    %821 = vmatpush.xpose.msra.mxu0 0.0
    %822 = vmatpush.xpose.msra.mxu0 0.0
    %823 = vmatpush.xpose.msra.mxu0 0.0
    %824 = vmatpush.xpose.msra.mxu0 0.0
    %825 = vmatpush.xpose.msra.mxu0 0.0
    %826 = vmatpush.xpose.msra.mxu0 %v427
    %827 = vmatmul.f32.gmra.mxu0 %v156
    %v828 = vpop.f32.mrf.mxu0
    %v829 = vadd.f32 %v809, %v828
    %830 = vdwg.mxu0
    %831 = vmatpush.xpose.msra.mxu0 0.0
    %832 = vmatpush.xpose.msra.mxu0 0.0
    %833 = vmatpush.xpose.msra.mxu0 0.0
    %834 = vmatpush.xpose.msra.mxu0 0.0
    %835 = vmatpush.xpose.msra.mxu0 0.0
    %836 = vmatpush.xpose.msra.mxu0 0.0
    %837 = vmatpush.xpose.msra.mxu0 0.0
    %838 = vmatpush.xpose.msra.mxu0 0.0
    %839 = vmatpush.xpose.msra.mxu0 0.0
    %840 = vmatpush.xpose.msra.mxu0 0.0
    %841 = vmatpush.xpose.msra.mxu0 0.0
    %842 = vmatpush.xpose.msra.mxu0 0.0
    %843 = vmatpush.xpose.msra.mxu0 0.0
    %844 = vmatpush.xpose.msra.mxu0 0.0
    %845 = vmatpush.xpose.msra.mxu0 0.0
    %846 = vmatpush.xpose.msra.mxu0 %v428
    %847 = vmatmul.f32.gmra.mxu0 %v157
    %v848 = vpop.f32.mrf.mxu0
    %v849 = vadd.f32 %v829, %v848
    %850 = vdwg.mxu0
    %851 = vmatpush.xpose.msra.mxu0 0.0
    %852 = vmatpush.xpose.msra.mxu0 0.0
    %853 = vmatpush.xpose.msra.mxu0 0.0
    %854 = vmatpush.xpose.msra.mxu0 0.0
    %855 = vmatpush.xpose.msra.mxu0 0.0
    %856 = vmatpush.xpose.msra.mxu0 0.0
    %857 = vmatpush.xpose.msra.mxu0 0.0
    %858 = vmatpush.xpose.msra.mxu0 0.0
    %859 = vmatpush.xpose.msra.mxu0 0.0
    %860 = vmatpush.xpose.msra.mxu0 0.0
    %861 = vmatpush.xpose.msra.mxu0 0.0
    %862 = vmatpush.xpose.msra.mxu0 0.0
    %863 = vmatpush.xpose.msra.mxu0 0.0
    %864 = vmatpush.xpose.msra.mxu0 0.0
    %865 = vmatpush.xpose.msra.mxu0 0.0
    %866 = vmatpush.xpose.msra.mxu0 %v429
    %867 = vmatmul.f32.gmra.mxu0 %v158
    %v868 = vpop.f32.mrf.mxu0
    %v869 = vadd.f32 %v849, %v868
    %870 = vdwg.mxu0
    %871 = vmatpush.xpose.msra.mxu0 0.0
    %872 = vmatpush.xpose.msra.mxu0 0.0
    %873 = vmatpush.xpose.msra.mxu0 0.0
    %874 = vmatpush.xpose.msra.mxu0 0.0
    %875 = vmatpush.xpose.msra.mxu0 0.0
    %876 = vmatpush.xpose.msra.mxu0 0.0
    %877 = vmatpush.xpose.msra.mxu0 0.0
    %878 = vmatpush.xpose.msra.mxu0 0.0
    %879 = vmatpush.xpose.msra.mxu0 0.0
    %880 = vmatpush.xpose.msra.mxu0 0.0
    %881 = vmatpush.xpose.msra.mxu0 0.0
    %882 = vmatpush.xpose.msra.mxu0 0.0
    %883 = vmatpush.xpose.msra.mxu0 0.0
    %884 = vmatpush.xpose.msra.mxu0 0.0
    %885 = vmatpush.xpose.msra.mxu0 0.0
    %886 = vmatpush.xpose.msra.mxu0 %v430
    %887 = vmatmul.f32.gmra.mxu0 %v159
    %v888 = vpop.f32.mrf.mxu0
    %v889 = vadd.f32 %v869, %v888
    %890 = vdwg.mxu0
    %891 = vmatpush.xpose.msra.mxu0 0.0
    %892 = vmatpush.xpose.msra.mxu0 0.0
    %893 = vmatpush.xpose.msra.mxu0 0.0
    %894 = vmatpush.xpose.msra.mxu0 0.0
    %895 = vmatpush.xpose.msra.mxu0 0.0
    %896 = vmatpush.xpose.msra.mxu0 0.0
    %897 = vmatpush.xpose.msra.mxu0 0.0
    %898 = vmatpush.xpose.msra.mxu0 0.0
    %899 = vmatpush.xpose.msra.mxu0 0.0
    %900 = vmatpush.xpose.msra.mxu0 0.0
    %901 = vmatpush.xpose.msra.mxu0 0.0
    %902 = vmatpush.xpose.msra.mxu0 0.0
    %903 = vmatpush.xpose.msra.mxu0 0.0
    %904 = vmatpush.xpose.msra.mxu0 0.0
    %905 = vmatpush.xpose.msra.mxu0 0.0
    %906 = vmatpush.xpose.msra.mxu0 %v431
    %907 = vmatmul.f32.gmra.mxu0 %v160
    %v908 = vpop.f32.mrf.mxu0
    %v909 = vadd.f32 %v889, %v908
    %910 = vdwg.mxu0
    %911 = vmatpush.xpose.msra.mxu0 0.0
    %912 = vmatpush.xpose.msra.mxu0 0.0
    %913 = vmatpush.xpose.msra.mxu0 0.0
    %914 = vmatpush.xpose.msra.mxu0 0.0
    %915 = vmatpush.xpose.msra.mxu0 0.0
    %916 = vmatpush.xpose.msra.mxu0 0.0
    %917 = vmatpush.xpose.msra.mxu0 0.0
    %918 = vmatpush.xpose.msra.mxu0 0.0
    %919 = vmatpush.xpose.msra.mxu0 0.0
    %920 = vmatpush.xpose.msra.mxu0 0.0
    %921 = vmatpush.xpose.msra.mxu0 0.0
    %922 = vmatpush.xpose.msra.mxu0 0.0
    %923 = vmatpush.xpose.msra.mxu0 0.0
    %924 = vmatpush.xpose.msra.mxu0 0.0
    %925 = vmatpush.xpose.msra.mxu0 0.0
    %926 = vmatpush.xpose.msra.mxu0 %v432
    %927 = vmatmul.f32.gmra.mxu0 %v161
    %v928 = vpop.f32.mrf.mxu0
    %v929 = vadd.f32 %v909, %v928
    %930 = vdwg.mxu0
    %931 = vmatpush.xpose.msra.mxu0 0.0
    %932 = vmatpush.xpose.msra.mxu0 0.0
    %933 = vmatpush.xpose.msra.mxu0 0.0
    %934 = vmatpush.xpose.msra.mxu0 0.0
    %935 = vmatpush.xpose.msra.mxu0 0.0
    %936 = vmatpush.xpose.msra.mxu0 0.0
    %937 = vmatpush.xpose.msra.mxu0 0.0
    %938 = vmatpush.xpose.msra.mxu0 0.0
    %939 = vmatpush.xpose.msra.mxu0 0.0
    %940 = vmatpush.xpose.msra.mxu0 0.0
    %941 = vmatpush.xpose.msra.mxu0 0.0
    %942 = vmatpush.xpose.msra.mxu0 0.0
    %943 = vmatpush.xpose.msra.mxu0 0.0
    %944 = vmatpush.xpose.msra.mxu0 0.0
    %945 = vmatpush.xpose.msra.mxu0 0.0
    %946 = vmatpush.xpose.msra.mxu0 %v433
    %947 = vmatmul.f32.gmra.mxu0 %v162
    %v948 = vpop.f32.mrf.mxu0
    %v949 = vadd.f32 %v929, %v948
    %950 = vdwg.mxu0
    %951 = vmatpush.xpose.msra.mxu0 0.0
    %952 = vmatpush.xpose.msra.mxu0 0.0
    %953 = vmatpush.xpose.msra.mxu0 0.0
    %954 = vmatpush.xpose.msra.mxu0 0.0
    %955 = vmatpush.xpose.msra.mxu0 0.0
    %956 = vmatpush.xpose.msra.mxu0 0.0
    %957 = vmatpush.xpose.msra.mxu0 0.0
    %958 = vmatpush.xpose.msra.mxu0 0.0
    %959 = vmatpush.xpose.msra.mxu0 0.0
    %960 = vmatpush.xpose.msra.mxu0 0.0
    %961 = vmatpush.xpose.msra.mxu0 0.0
    %962 = vmatpush.xpose.msra.mxu0 0.0
    %963 = vmatpush.xpose.msra.mxu0 0.0
    %964 = vmatpush.xpose.msra.mxu0 0.0
    %965 = vmatpush.xpose.msra.mxu0 0.0
    %966 = vmatpush.xpose.msra.mxu0 %v434
    %967 = vmatmul.f32.gmra.mxu0 %v163
    %v968 = vpop.f32.mrf.mxu0
    %v969 = vadd.f32 %v949, %v968
    %970 = vdwg.mxu0
    %971 = vmatpush.xpose.msra.mxu0 0.0
    %972 = vmatpush.xpose.msra.mxu0 0.0
    %973 = vmatpush.xpose.msra.mxu0 0.0
    %974 = vmatpush.xpose.msra.mxu0 0.0
    %975 = vmatpush.xpose.msra.mxu0 0.0
    %976 = vmatpush.xpose.msra.mxu0 0.0
    %977 = vmatpush.xpose.msra.mxu0 0.0
    %978 = vmatpush.xpose.msra.mxu0 0.0
    %979 = vmatpush.xpose.msra.mxu0 0.0
    %980 = vmatpush.xpose.msra.mxu0 0.0
    %981 = vmatpush.xpose.msra.mxu0 0.0
    %982 = vmatpush.xpose.msra.mxu0 0.0
    %983 = vmatpush.xpose.msra.mxu0 0.0
    %984 = vmatpush.xpose.msra.mxu0 0.0
    %985 = vmatpush.xpose.msra.mxu0 0.0
    %986 = vmatpush.xpose.msra.mxu0 %v439
    %987 = vmatmul.f32.gmra.mxu0 %v166
    %v988 = vpop.f32.mrf.mxu0
    %v989 = vadd.f32 %v969, %v988
    %990 = vdwg.mxu0
    %991 = vmatpush.xpose.msra.mxu0 0.0
    %992 = vmatpush.xpose.msra.mxu0 0.0
    %993 = vmatpush.xpose.msra.mxu0 0.0
    %994 = vmatpush.xpose.msra.mxu0 0.0
    %995 = vmatpush.xpose.msra.mxu0 0.0
    %996 = vmatpush.xpose.msra.mxu0 0.0
    %997 = vmatpush.xpose.msra.mxu0 0.0
    %998 = vmatpush.xpose.msra.mxu0 0.0
    %999 = vmatpush.xpose.msra.mxu0 0.0
    %1000 = vmatpush.xpose.msra.mxu0 0.0
    %1001 = vmatpush.xpose.msra.mxu0 0.0
    %1002 = vmatpush.xpose.msra.mxu0 0.0
    %1003 = vmatpush.xpose.msra.mxu0 0.0
    %1004 = vmatpush.xpose.msra.mxu0 0.0
    %1005 = vmatpush.xpose.msra.mxu0 0.0
    %1006 = vmatpush.xpose.msra.mxu0 %v440
    %1007 = vmatmul.f32.gmra.mxu0 %v167
    %v1008 = vpop.f32.mrf.mxu0
    %v1009 = vadd.f32 %v989, %v1008
    %1010 = vdwg.mxu0
    %1011 = vmatpush.xpose.msra.mxu0 0.0
    %1012 = vmatpush.xpose.msra.mxu0 0.0
    %1013 = vmatpush.xpose.msra.mxu0 0.0
    %1014 = vmatpush.xpose.msra.mxu0 0.0
    %1015 = vmatpush.xpose.msra.mxu0 0.0
    %1016 = vmatpush.xpose.msra.mxu0 0.0
    %1017 = vmatpush.xpose.msra.mxu0 0.0
    %1018 = vmatpush.xpose.msra.mxu0 0.0
    %1019 = vmatpush.xpose.msra.mxu0 0.0
    %1020 = vmatpush.xpose.msra.mxu0 0.0
    %1021 = vmatpush.xpose.msra.mxu0 0.0
    %1022 = vmatpush.xpose.msra.mxu0 0.0
    %1023 = vmatpush.xpose.msra.mxu0 0.0
    %1024 = vmatpush.xpose.msra.mxu0 0.0
    %1025 = vmatpush.xpose.msra.mxu0 0.0
    %1026 = vmatpush.xpose.msra.mxu0 %v441
    %1027 = vmatmul.f32.gmra.mxu0 %v168
    %v1028 = vpop.f32.mrf.mxu0
    %v1029 = vadd.f32 %v1009, %v1028
    %1030 = vdwg.mxu0
    %1031 = vmatpush.xpose.msra.mxu0 0.0
    %1032 = vmatpush.xpose.msra.mxu0 0.0
    %1033 = vmatpush.xpose.msra.mxu0 0.0
    %1034 = vmatpush.xpose.msra.mxu0 0.0
    %1035 = vmatpush.xpose.msra.mxu0 0.0
    %1036 = vmatpush.xpose.msra.mxu0 0.0
    %1037 = vmatpush.xpose.msra.mxu0 0.0
    %1038 = vmatpush.xpose.msra.mxu0 0.0
    %1039 = vmatpush.xpose.msra.mxu0 0.0
    %1040 = vmatpush.xpose.msra.mxu0 0.0
    %1041 = vmatpush.xpose.msra.mxu0 0.0
    %1042 = vmatpush.xpose.msra.mxu0 0.0
    %1043 = vmatpush.xpose.msra.mxu0 0.0
    %1044 = vmatpush.xpose.msra.mxu0 0.0
    %1045 = vmatpush.xpose.msra.mxu0 0.0
    %1046 = vmatpush.xpose.msra.mxu0 %v442
    %1047 = vmatmul.f32.gmra.mxu0 %v169
    %v1048 = vpop.f32.mrf.mxu0
    %v1049 = vadd.f32 %v1029, %v1048
    %1050 = vdwg.mxu0
    %1051 = vmatpush.xpose.msra.mxu0 0.0
    %1052 = vmatpush.xpose.msra.mxu0 0.0
    %1053 = vmatpush.xpose.msra.mxu0 0.0
    %1054 = vmatpush.xpose.msra.mxu0 0.0
    %1055 = vmatpush.xpose.msra.mxu0 0.0
    %1056 = vmatpush.xpose.msra.mxu0 0.0
    %1057 = vmatpush.xpose.msra.mxu0 0.0
    %1058 = vmatpush.xpose.msra.mxu0 0.0
    %1059 = vmatpush.xpose.msra.mxu0 0.0
    %1060 = vmatpush.xpose.msra.mxu0 0.0
    %1061 = vmatpush.xpose.msra.mxu0 0.0
    %1062 = vmatpush.xpose.msra.mxu0 0.0
    %1063 = vmatpush.xpose.msra.mxu0 0.0
    %1064 = vmatpush.xpose.msra.mxu0 0.0
    %1065 = vmatpush.xpose.msra.mxu0 0.0
    %1066 = vmatpush.xpose.msra.mxu0 %v443
    %1067 = vmatmul.f32.gmra.mxu0 %v170
    %v1068 = vpop.f32.mrf.mxu0
    %v1069 = vadd.f32 %v1049, %v1068
    %1070 = vdwg.mxu0
    %1071 = vmatpush.xpose.msra.mxu0 0.0
    %1072 = vmatpush.xpose.msra.mxu0 0.0
    %1073 = vmatpush.xpose.msra.mxu0 0.0
    %1074 = vmatpush.xpose.msra.mxu0 0.0
    %1075 = vmatpush.xpose.msra.mxu0 0.0
    %1076 = vmatpush.xpose.msra.mxu0 0.0
    %1077 = vmatpush.xpose.msra.mxu0 0.0
    %1078 = vmatpush.xpose.msra.mxu0 0.0
    %1079 = vmatpush.xpose.msra.mxu0 0.0
    %1080 = vmatpush.xpose.msra.mxu0 0.0
    %1081 = vmatpush.xpose.msra.mxu0 0.0
    %1082 = vmatpush.xpose.msra.mxu0 0.0
    %1083 = vmatpush.xpose.msra.mxu0 0.0
    %1084 = vmatpush.xpose.msra.mxu0 0.0
    %1085 = vmatpush.xpose.msra.mxu0 0.0
    %1086 = vmatpush.xpose.msra.mxu0 %v444
    %1087 = vmatmul.f32.gmra.mxu0 %v171
    %v1088 = vpop.f32.mrf.mxu0
    %v1089 = vadd.f32 %v1069, %v1088
    %1090 = vdwg.mxu0
    %1091 = vmatpush.xpose.msra.mxu0 0.0
    %1092 = vmatpush.xpose.msra.mxu0 0.0
    %1093 = vmatpush.xpose.msra.mxu0 0.0
    %1094 = vmatpush.xpose.msra.mxu0 0.0
    %1095 = vmatpush.xpose.msra.mxu0 0.0
    %1096 = vmatpush.xpose.msra.mxu0 0.0
    %1097 = vmatpush.xpose.msra.mxu0 0.0
    %1098 = vmatpush.xpose.msra.mxu0 0.0
    %1099 = vmatpush.xpose.msra.mxu0 0.0
    %1100 = vmatpush.xpose.msra.mxu0 0.0
    %1101 = vmatpush.xpose.msra.mxu0 0.0
    %1102 = vmatpush.xpose.msra.mxu0 0.0
    %1103 = vmatpush.xpose.msra.mxu0 0.0
    %1104 = vmatpush.xpose.msra.mxu0 0.0
    %1105 = vmatpush.xpose.msra.mxu0 0.0
    %1106 = vmatpush.xpose.msra.mxu0 %v445
    %1107 = vmatmul.f32.gmra.mxu0 %v172
    %v1108 = vpop.f32.mrf.mxu0
    %v1109 = vadd.f32 %v1089, %v1108
    %1110 = vdwg.mxu0
    %1111 = vmatpush.xpose.msra.mxu0 0.0
    %1112 = vmatpush.xpose.msra.mxu0 0.0
    %1113 = vmatpush.xpose.msra.mxu0 0.0
    %1114 = vmatpush.xpose.msra.mxu0 0.0
    %1115 = vmatpush.xpose.msra.mxu0 0.0
    %1116 = vmatpush.xpose.msra.mxu0 0.0
    %1117 = vmatpush.xpose.msra.mxu0 0.0
    %1118 = vmatpush.xpose.msra.mxu0 0.0
    %1119 = vmatpush.xpose.msra.mxu0 0.0
    %1120 = vmatpush.xpose.msra.mxu0 0.0
    %1121 = vmatpush.xpose.msra.mxu0 0.0
    %1122 = vmatpush.xpose.msra.mxu0 0.0
    %1123 = vmatpush.xpose.msra.mxu0 0.0
    %1124 = vmatpush.xpose.msra.mxu0 0.0
    %1125 = vmatpush.xpose.msra.mxu0 0.0
    %1126 = vmatpush.xpose.msra.mxu0 %v446
    %1127 = vmatmul.f32.gmra.mxu0 %v173
    %v1128 = vpop.f32.mrf.mxu0
    %v1129 = vadd.f32 %v1109, %v1128
    %1130 = vdwg.mxu0
    %1131 = vmatpush.xpose.msra.mxu0 0.0
    %1132 = vmatpush.xpose.msra.mxu0 0.0
    %1133 = vmatpush.xpose.msra.mxu0 0.0
    %1134 = vmatpush.xpose.msra.mxu0 0.0
    %1135 = vmatpush.xpose.msra.mxu0 0.0
    %1136 = vmatpush.xpose.msra.mxu0 0.0
    %1137 = vmatpush.xpose.msra.mxu0 0.0
    %1138 = vmatpush.xpose.msra.mxu0 0.0
    %1139 = vmatpush.xpose.msra.mxu0 0.0
    %1140 = vmatpush.xpose.msra.mxu0 0.0
    %1141 = vmatpush.xpose.msra.mxu0 0.0
    %1142 = vmatpush.xpose.msra.mxu0 0.0
    %1143 = vmatpush.xpose.msra.mxu0 0.0
    %1144 = vmatpush.xpose.msra.mxu0 0.0
    %1145 = vmatpush.xpose.msra.mxu0 0.0
    %1146 = vmatpush.xpose.msra.mxu0 %v451
    %1147 = vmatmul.f32.gmra.mxu0 %v176
    %v1148 = vpop.f32.mrf.mxu0
    %v1149 = vadd.f32 %v1129, %v1148
    %1150 = vdwg.mxu0
    %1151 = vmatpush.xpose.msra.mxu0 0.0
    %1152 = vmatpush.xpose.msra.mxu0 0.0
    %1153 = vmatpush.xpose.msra.mxu0 0.0
    %1154 = vmatpush.xpose.msra.mxu0 0.0
    %1155 = vmatpush.xpose.msra.mxu0 0.0
    %1156 = vmatpush.xpose.msra.mxu0 0.0
    %1157 = vmatpush.xpose.msra.mxu0 0.0
    %1158 = vmatpush.xpose.msra.mxu0 0.0
    %1159 = vmatpush.xpose.msra.mxu0 0.0
    %1160 = vmatpush.xpose.msra.mxu0 0.0
    %1161 = vmatpush.xpose.msra.mxu0 0.0
    %1162 = vmatpush.xpose.msra.mxu0 0.0
    %1163 = vmatpush.xpose.msra.mxu0 0.0
    %1164 = vmatpush.xpose.msra.mxu0 0.0
    %1165 = vmatpush.xpose.msra.mxu0 0.0
    %1166 = vmatpush.xpose.msra.mxu0 %v452
    %1167 = vmatmul.f32.gmra.mxu0 %v177
    %v1168 = vpop.f32.mrf.mxu0
    %v1169 = vadd.f32 %v1149, %v1168
    %1170 = vdwg.mxu0
    %1171 = vmatpush.xpose.msra.mxu0 0.0
    %1172 = vmatpush.xpose.msra.mxu0 0.0
    %1173 = vmatpush.xpose.msra.mxu0 0.0
    %1174 = vmatpush.xpose.msra.mxu0 0.0
    %1175 = vmatpush.xpose.msra.mxu0 0.0
    %1176 = vmatpush.xpose.msra.mxu0 0.0
    %1177 = vmatpush.xpose.msra.mxu0 0.0
    %1178 = vmatpush.xpose.msra.mxu0 0.0
    %1179 = vmatpush.xpose.msra.mxu0 0.0
    %1180 = vmatpush.xpose.msra.mxu0 0.0
    %1181 = vmatpush.xpose.msra.mxu0 0.0
    %1182 = vmatpush.xpose.msra.mxu0 0.0
    %1183 = vmatpush.xpose.msra.mxu0 0.0
    %1184 = vmatpush.xpose.msra.mxu0 0.0
    %1185 = vmatpush.xpose.msra.mxu0 0.0
    %1186 = vmatpush.xpose.msra.mxu0 %v453
    %1187 = vmatmul.f32.gmra.mxu0 %v178
    %v1188 = vpop.f32.mrf.mxu0
    %v1189 = vadd.f32 %v1169, %v1188
    %1190 = vdwg.mxu0
    %1191 = vmatpush.xpose.msra.mxu0 0.0
    %1192 = vmatpush.xpose.msra.mxu0 0.0
    %1193 = vmatpush.xpose.msra.mxu0 0.0
    %1194 = vmatpush.xpose.msra.mxu0 0.0
    %1195 = vmatpush.xpose.msra.mxu0 0.0
    %1196 = vmatpush.xpose.msra.mxu0 0.0
    %1197 = vmatpush.xpose.msra.mxu0 0.0
    %1198 = vmatpush.xpose.msra.mxu0 0.0
    %1199 = vmatpush.xpose.msra.mxu0 0.0
    %1200 = vmatpush.xpose.msra.mxu0 0.0
    %1201 = vmatpush.xpose.msra.mxu0 0.0
    %1202 = vmatpush.xpose.msra.mxu0 0.0
    %1203 = vmatpush.xpose.msra.mxu0 0.0
    %1204 = vmatpush.xpose.msra.mxu0 0.0
    %1205 = vmatpush.xpose.msra.mxu0 0.0
    %1206 = vmatpush.xpose.msra.mxu0 %v454
    %1207 = vmatmul.f32.gmra.mxu0 %v179
    %v1208 = vpop.f32.mrf.mxu0
    %v1209 = vadd.f32 %v1189, %v1208
    %1210 = vdwg.mxu0
    %1211 = vmatpush.xpose.msra.mxu0 0.0
    %1212 = vmatpush.xpose.msra.mxu0 0.0
    %1213 = vmatpush.xpose.msra.mxu0 0.0
    %1214 = vmatpush.xpose.msra.mxu0 0.0
    %1215 = vmatpush.xpose.msra.mxu0 0.0
    %1216 = vmatpush.xpose.msra.mxu0 0.0
    %1217 = vmatpush.xpose.msra.mxu0 0.0
    %1218 = vmatpush.xpose.msra.mxu0 0.0
    %1219 = vmatpush.xpose.msra.mxu0 0.0
    %1220 = vmatpush.xpose.msra.mxu0 0.0
    %1221 = vmatpush.xpose.msra.mxu0 0.0
    %1222 = vmatpush.xpose.msra.mxu0 0.0
    %1223 = vmatpush.xpose.msra.mxu0 0.0
    %1224 = vmatpush.xpose.msra.mxu0 0.0
    %1225 = vmatpush.xpose.msra.mxu0 0.0
    %1226 = vmatpush.xpose.msra.mxu0 %v455
    %1227 = vmatmul.f32.gmra.mxu0 %v180
    %v1228 = vpop.f32.mrf.mxu0
    %v1229 = vadd.f32 %v1209, %v1228
    %1230 = vdwg.mxu0
    %1231 = vmatpush.xpose.msra.mxu0 0.0
    %1232 = vmatpush.xpose.msra.mxu0 0.0
    %1233 = vmatpush.xpose.msra.mxu0 0.0
    %1234 = vmatpush.xpose.msra.mxu0 0.0
    %1235 = vmatpush.xpose.msra.mxu0 0.0
    %1236 = vmatpush.xpose.msra.mxu0 0.0
    %1237 = vmatpush.xpose.msra.mxu0 0.0
    %1238 = vmatpush.xpose.msra.mxu0 0.0
    %1239 = vmatpush.xpose.msra.mxu0 0.0
    %1240 = vmatpush.xpose.msra.mxu0 0.0
    %1241 = vmatpush.xpose.msra.mxu0 0.0
    %1242 = vmatpush.xpose.msra.mxu0 0.0
    %1243 = vmatpush.xpose.msra.mxu0 0.0
    %1244 = vmatpush.xpose.msra.mxu0 0.0
    %1245 = vmatpush.xpose.msra.mxu0 0.0
    %1246 = vmatpush.xpose.msra.mxu0 %v456
    %1247 = vmatmul.f32.gmra.mxu0 %v181
    %v1248 = vpop.f32.mrf.mxu0
    %v1249 = vadd.f32 %v1229, %v1248
    %1250 = vdwg.mxu0
    %1251 = vmatpush.xpose.msra.mxu0 0.0
    %1252 = vmatpush.xpose.msra.mxu0 0.0
    %1253 = vmatpush.xpose.msra.mxu0 0.0
    %1254 = vmatpush.xpose.msra.mxu0 0.0
    %1255 = vmatpush.xpose.msra.mxu0 0.0
    %1256 = vmatpush.xpose.msra.mxu0 0.0
    %1257 = vmatpush.xpose.msra.mxu0 0.0
    %1258 = vmatpush.xpose.msra.mxu0 0.0
    %1259 = vmatpush.xpose.msra.mxu0 0.0
    %1260 = vmatpush.xpose.msra.mxu0 0.0
    %1261 = vmatpush.xpose.msra.mxu0 0.0
    %1262 = vmatpush.xpose.msra.mxu0 0.0
    %1263 = vmatpush.xpose.msra.mxu0 0.0
    %1264 = vmatpush.xpose.msra.mxu0 0.0
    %1265 = vmatpush.xpose.msra.mxu0 0.0
    %1266 = vmatpush.xpose.msra.mxu0 %v457
    %1267 = vmatmul.f32.gmra.mxu0 %v182
    %v1268 = vpop.f32.mrf.mxu0
    %v1269 = vadd.f32 %v1249, %v1268
    %1270 = vdwg.mxu0
    %1271 = vmatpush.xpose.msra.mxu0 0.0
    %1272 = vmatpush.xpose.msra.mxu0 0.0
    %1273 = vmatpush.xpose.msra.mxu0 0.0
    %1274 = vmatpush.xpose.msra.mxu0 0.0
    %1275 = vmatpush.xpose.msra.mxu0 0.0
    %1276 = vmatpush.xpose.msra.mxu0 0.0
    %1277 = vmatpush.xpose.msra.mxu0 0.0
    %1278 = vmatpush.xpose.msra.mxu0 0.0
    %1279 = vmatpush.xpose.msra.mxu0 0.0
    %1280 = vmatpush.xpose.msra.mxu0 0.0
    %1281 = vmatpush.xpose.msra.mxu0 0.0
    %1282 = vmatpush.xpose.msra.mxu0 0.0
    %1283 = vmatpush.xpose.msra.mxu0 0.0
    %1284 = vmatpush.xpose.msra.mxu0 0.0
    %1285 = vmatpush.xpose.msra.mxu0 0.0
    %1286 = vmatpush.xpose.msra.mxu0 %v458
    %1287 = vmatmul.f32.gmra.mxu0 %v183
    %v1288 = vpop.f32.mrf.mxu0
    %v1289 = vadd.f32 %v1269, %v1288
    %1290 = vdwg.mxu0
    %1291 = vmatpush.xpose.msra.mxu0 0.0
    %1292 = vmatpush.xpose.msra.mxu0 0.0
    %1293 = vmatpush.xpose.msra.mxu0 0.0
    %1294 = vmatpush.xpose.msra.mxu0 0.0
    %1295 = vmatpush.xpose.msra.mxu0 0.0
    %1296 = vmatpush.xpose.msra.mxu0 0.0
    %1297 = vmatpush.xpose.msra.mxu0 0.0
    %1298 = vmatpush.xpose.msra.mxu0 0.0
    %1299 = vmatpush.xpose.msra.mxu0 0.0
    %1300 = vmatpush.xpose.msra.mxu0 0.0
    %1301 = vmatpush.xpose.msra.mxu0 0.0
    %1302 = vmatpush.xpose.msra.mxu0 0.0
    %1303 = vmatpush.xpose.msra.mxu0 0.0
    %1304 = vmatpush.xpose.msra.mxu0 0.0
    %1305 = vmatpush.xpose.msra.mxu0 0.0
    %1306 = vmatpush.xpose.msra.mxu0 %v463
    %1307 = vmatmul.f32.gmra.mxu0 %v186
    %v1308 = vpop.f32.mrf.mxu0
    %v1309 = vadd.f32 %v1289, %v1308
    %1310 = vdwg.mxu0
    %1311 = vmatpush.xpose.msra.mxu0 0.0
    %1312 = vmatpush.xpose.msra.mxu0 0.0
    %1313 = vmatpush.xpose.msra.mxu0 0.0
    %1314 = vmatpush.xpose.msra.mxu0 0.0
    %1315 = vmatpush.xpose.msra.mxu0 0.0
    %1316 = vmatpush.xpose.msra.mxu0 0.0
    %1317 = vmatpush.xpose.msra.mxu0 0.0
    %1318 = vmatpush.xpose.msra.mxu0 0.0
    %1319 = vmatpush.xpose.msra.mxu0 0.0
    %1320 = vmatpush.xpose.msra.mxu0 0.0
    %1321 = vmatpush.xpose.msra.mxu0 0.0
    %1322 = vmatpush.xpose.msra.mxu0 0.0
    %1323 = vmatpush.xpose.msra.mxu0 0.0
    %1324 = vmatpush.xpose.msra.mxu0 0.0
    %1325 = vmatpush.xpose.msra.mxu0 0.0
    %1326 = vmatpush.xpose.msra.mxu0 %v464
    %1327 = vmatmul.f32.gmra.mxu0 %v187
    %v1328 = vpop.f32.mrf.mxu0
    %v1329 = vadd.f32 %v1309, %v1328
    %1330 = vdwg.mxu0
    %1331 = vmatpush.xpose.msra.mxu0 0.0
    %1332 = vmatpush.xpose.msra.mxu0 0.0
    %1333 = vmatpush.xpose.msra.mxu0 0.0
    %1334 = vmatpush.xpose.msra.mxu0 0.0
    %1335 = vmatpush.xpose.msra.mxu0 0.0
    %1336 = vmatpush.xpose.msra.mxu0 0.0
    %1337 = vmatpush.xpose.msra.mxu0 0.0
    %1338 = vmatpush.xpose.msra.mxu0 0.0
    %1339 = vmatpush.xpose.msra.mxu0 0.0
    %1340 = vmatpush.xpose.msra.mxu0 0.0
    %1341 = vmatpush.xpose.msra.mxu0 0.0
    %1342 = vmatpush.xpose.msra.mxu0 0.0
    %1343 = vmatpush.xpose.msra.mxu0 0.0
    %1344 = vmatpush.xpose.msra.mxu0 0.0
    %1345 = vmatpush.xpose.msra.mxu0 0.0
    %1346 = vmatpush.xpose.msra.mxu0 %v465
    %1347 = vmatmul.f32.gmra.mxu0 %v188
    %v1348 = vpop.f32.mrf.mxu0
    %v1349 = vadd.f32 %v1329, %v1348
    %1350 = vdwg.mxu0
    %1351 = vmatpush.xpose.msra.mxu0 0.0
    %1352 = vmatpush.xpose.msra.mxu0 0.0
    %1353 = vmatpush.xpose.msra.mxu0 0.0
    %1354 = vmatpush.xpose.msra.mxu0 0.0
    %1355 = vmatpush.xpose.msra.mxu0 0.0
    %1356 = vmatpush.xpose.msra.mxu0 0.0
    %1357 = vmatpush.xpose.msra.mxu0 0.0
    %1358 = vmatpush.xpose.msra.mxu0 0.0
    %1359 = vmatpush.xpose.msra.mxu0 0.0
    %1360 = vmatpush.xpose.msra.mxu0 0.0
    %1361 = vmatpush.xpose.msra.mxu0 0.0
    %1362 = vmatpush.xpose.msra.mxu0 0.0
    %1363 = vmatpush.xpose.msra.mxu0 0.0
    %1364 = vmatpush.xpose.msra.mxu0 0.0
    %1365 = vmatpush.xpose.msra.mxu0 0.0
    %1366 = vmatpush.xpose.msra.mxu0 %v466
    %1367 = vmatmul.f32.gmra.mxu0 %v189
    %v1368 = vpop.f32.mrf.mxu0
    %v1369 = vadd.f32 %v1349, %v1368
    %1370 = vdwg.mxu0
    %1371 = vmatpush.xpose.msra.mxu0 0.0
    %1372 = vmatpush.xpose.msra.mxu0 0.0
    %1373 = vmatpush.xpose.msra.mxu0 0.0
    %1374 = vmatpush.xpose.msra.mxu0 0.0
    %1375 = vmatpush.xpose.msra.mxu0 0.0
    %1376 = vmatpush.xpose.msra.mxu0 0.0
    %1377 = vmatpush.xpose.msra.mxu0 0.0
    %1378 = vmatpush.xpose.msra.mxu0 0.0
    %1379 = vmatpush.xpose.msra.mxu0 0.0
    %1380 = vmatpush.xpose.msra.mxu0 0.0
    %1381 = vmatpush.xpose.msra.mxu0 0.0
    %1382 = vmatpush.xpose.msra.mxu0 0.0
    %1383 = vmatpush.xpose.msra.mxu0 0.0
    %1384 = vmatpush.xpose.msra.mxu0 0.0
    %1385 = vmatpush.xpose.msra.mxu0 0.0
    %1386 = vmatpush.xpose.msra.mxu0 %v467
    %1387 = vmatmul.f32.gmra.mxu0 %v190
    %v1388 = vpop.f32.mrf.mxu0
    %v1389 = vadd.f32 %v1369, %v1388
    %1390 = vdwg.mxu0
    %1391 = vmatpush.xpose.msra.mxu0 0.0
    %1392 = vmatpush.xpose.msra.mxu0 0.0
    %1393 = vmatpush.xpose.msra.mxu0 0.0
    %1394 = vmatpush.xpose.msra.mxu0 0.0
    %1395 = vmatpush.xpose.msra.mxu0 0.0
    %1396 = vmatpush.xpose.msra.mxu0 0.0
    %1397 = vmatpush.xpose.msra.mxu0 0.0
    %1398 = vmatpush.xpose.msra.mxu0 0.0
    %1399 = vmatpush.xpose.msra.mxu0 0.0
    %1400 = vmatpush.xpose.msra.mxu0 0.0
    %1401 = vmatpush.xpose.msra.mxu0 0.0
    %1402 = vmatpush.xpose.msra.mxu0 0.0
    %1403 = vmatpush.xpose.msra.mxu0 0.0
    %1404 = vmatpush.xpose.msra.mxu0 0.0
    %1405 = vmatpush.xpose.msra.mxu0 0.0
    %1406 = vmatpush.xpose.msra.mxu0 %v468
    %1407 = vmatmul.f32.gmra.mxu0 %v191
    %v1408 = vpop.f32.mrf.mxu0
    %v1409 = vadd.f32 %v1389, %v1408
    %1410 = vdwg.mxu0
    %1411 = vmatpush.xpose.msra.mxu0 0.0
    %1412 = vmatpush.xpose.msra.mxu0 0.0
    %1413 = vmatpush.xpose.msra.mxu0 0.0
    %1414 = vmatpush.xpose.msra.mxu0 0.0
    %1415 = vmatpush.xpose.msra.mxu0 0.0
    %1416 = vmatpush.xpose.msra.mxu0 0.0
    %1417 = vmatpush.xpose.msra.mxu0 0.0
    %1418 = vmatpush.xpose.msra.mxu0 0.0
    %1419 = vmatpush.xpose.msra.mxu0 0.0
    %1420 = vmatpush.xpose.msra.mxu0 0.0
    %1421 = vmatpush.xpose.msra.mxu0 0.0
    %1422 = vmatpush.xpose.msra.mxu0 0.0
    %1423 = vmatpush.xpose.msra.mxu0 0.0
    %1424 = vmatpush.xpose.msra.mxu0 0.0
    %1425 = vmatpush.xpose.msra.mxu0 0.0
    %1426 = vmatpush.xpose.msra.mxu0 %v469
    %1427 = vmatmul.f32.gmra.mxu0 %v192
    %v1428 = vpop.f32.mrf.mxu0
    %v1429 = vadd.f32 %v1409, %v1428
    %1430 = vdwg.mxu0
    %1431 = vmatpush.xpose.msra.mxu0 0.0
    %1432 = vmatpush.xpose.msra.mxu0 0.0
    %1433 = vmatpush.xpose.msra.mxu0 0.0
    %1434 = vmatpush.xpose.msra.mxu0 0.0
    %1435 = vmatpush.xpose.msra.mxu0 0.0
    %1436 = vmatpush.xpose.msra.mxu0 0.0
    %1437 = vmatpush.xpose.msra.mxu0 0.0
    %1438 = vmatpush.xpose.msra.mxu0 0.0
    %1439 = vmatpush.xpose.msra.mxu0 0.0
    %1440 = vmatpush.xpose.msra.mxu0 0.0
    %1441 = vmatpush.xpose.msra.mxu0 0.0
    %1442 = vmatpush.xpose.msra.mxu0 0.0
    %1443 = vmatpush.xpose.msra.mxu0 0.0
    %1444 = vmatpush.xpose.msra.mxu0 0.0
    %1445 = vmatpush.xpose.msra.mxu0 0.0
    %1446 = vmatpush.xpose.msra.mxu0 %v470
    %1447 = vmatmul.f32.gmra.mxu0 %v193
    %v1448 = vpop.f32.mrf.mxu0
    %v1449 = vadd.f32 %v1429, %v1448
    %1450 = vdwg.mxu0
    %1451 = vmatpush.xpose.msra.mxu0 0.0
    %1452 = vmatpush.xpose.msra.mxu0 0.0
    %1453 = vmatpush.xpose.msra.mxu0 0.0
    %1454 = vmatpush.xpose.msra.mxu0 0.0
    %1455 = vmatpush.xpose.msra.mxu0 0.0
    %1456 = vmatpush.xpose.msra.mxu0 0.0
    %1457 = vmatpush.xpose.msra.mxu0 0.0
    %1458 = vmatpush.xpose.msra.mxu0 0.0
    %1459 = vmatpush.xpose.msra.mxu0 0.0
    %1460 = vmatpush.xpose.msra.mxu0 0.0
    %1461 = vmatpush.xpose.msra.mxu0 0.0
    %1462 = vmatpush.xpose.msra.mxu0 0.0
    %1463 = vmatpush.xpose.msra.mxu0 0.0
    %1464 = vmatpush.xpose.msra.mxu0 0.0
    %1465 = vmatpush.xpose.msra.mxu0 0.0
    %1466 = vmatpush.xpose.msra.mxu0 %v475
    %1467 = vmatmul.f32.gmra.mxu0 %v196
    %v1468 = vpop.f32.mrf.mxu0
    %v1469 = vadd.f32 %v1449, %v1468
    %1470 = vdwg.mxu0
    %1471 = vmatpush.xpose.msra.mxu0 0.0
    %1472 = vmatpush.xpose.msra.mxu0 0.0
    %1473 = vmatpush.xpose.msra.mxu0 0.0
    %1474 = vmatpush.xpose.msra.mxu0 0.0
    %1475 = vmatpush.xpose.msra.mxu0 0.0
    %1476 = vmatpush.xpose.msra.mxu0 0.0
    %1477 = vmatpush.xpose.msra.mxu0 0.0
    %1478 = vmatpush.xpose.msra.mxu0 0.0
    %1479 = vmatpush.xpose.msra.mxu0 0.0
    %1480 = vmatpush.xpose.msra.mxu0 0.0
    %1481 = vmatpush.xpose.msra.mxu0 0.0
    %1482 = vmatpush.xpose.msra.mxu0 0.0
    %1483 = vmatpush.xpose.msra.mxu0 0.0
    %1484 = vmatpush.xpose.msra.mxu0 0.0
    %1485 = vmatpush.xpose.msra.mxu0 0.0
    %1486 = vmatpush.xpose.msra.mxu0 %v476
    %1487 = vmatmul.f32.gmra.mxu0 %v197
    %v1488 = vpop.f32.mrf.mxu0
    %v1489 = vadd.f32 %v1469, %v1488
    %1490 = vdwg.mxu0
    %1491 = vmatpush.xpose.msra.mxu0 0.0
    %1492 = vmatpush.xpose.msra.mxu0 0.0
    %1493 = vmatpush.xpose.msra.mxu0 0.0
    %1494 = vmatpush.xpose.msra.mxu0 0.0
    %1495 = vmatpush.xpose.msra.mxu0 0.0
    %1496 = vmatpush.xpose.msra.mxu0 0.0
    %1497 = vmatpush.xpose.msra.mxu0 0.0
    %1498 = vmatpush.xpose.msra.mxu0 0.0
    %1499 = vmatpush.xpose.msra.mxu0 0.0
    %1500 = vmatpush.xpose.msra.mxu0 0.0
    %1501 = vmatpush.xpose.msra.mxu0 0.0
    %1502 = vmatpush.xpose.msra.mxu0 0.0
    %1503 = vmatpush.xpose.msra.mxu0 0.0
    %1504 = vmatpush.xpose.msra.mxu0 0.0
    %1505 = vmatpush.xpose.msra.mxu0 0.0
    %1506 = vmatpush.xpose.msra.mxu0 %v477
    %1507 = vmatmul.f32.gmra.mxu0 %v198
    %v1508 = vpop.f32.mrf.mxu0
    %v1509 = vadd.f32 %v1489, %v1508
    %1510 = vdwg.mxu0
    %1511 = vmatpush.xpose.msra.mxu0 0.0
    %1512 = vmatpush.xpose.msra.mxu0 0.0
    %1513 = vmatpush.xpose.msra.mxu0 0.0
    %1514 = vmatpush.xpose.msra.mxu0 0.0
    %1515 = vmatpush.xpose.msra.mxu0 0.0
    %1516 = vmatpush.xpose.msra.mxu0 0.0
    %1517 = vmatpush.xpose.msra.mxu0 0.0
    %1518 = vmatpush.xpose.msra.mxu0 0.0
    %1519 = vmatpush.xpose.msra.mxu0 0.0
    %1520 = vmatpush.xpose.msra.mxu0 0.0
    %1521 = vmatpush.xpose.msra.mxu0 0.0
    %1522 = vmatpush.xpose.msra.mxu0 0.0
    %1523 = vmatpush.xpose.msra.mxu0 0.0
    %1524 = vmatpush.xpose.msra.mxu0 0.0
    %1525 = vmatpush.xpose.msra.mxu0 0.0
    %1526 = vmatpush.xpose.msra.mxu0 %v478
    %1527 = vmatmul.f32.gmra.mxu0 %v199
    %v1528 = vpop.f32.mrf.mxu0
    %v1529 = vadd.f32 %v1509, %v1528
    %1530 = vdwg.mxu0
    %1531 = vmatpush.xpose.msra.mxu0 0.0
    %1532 = vmatpush.xpose.msra.mxu0 0.0
    %1533 = vmatpush.xpose.msra.mxu0 0.0
    %1534 = vmatpush.xpose.msra.mxu0 0.0
    %1535 = vmatpush.xpose.msra.mxu0 0.0
    %1536 = vmatpush.xpose.msra.mxu0 0.0
    %1537 = vmatpush.xpose.msra.mxu0 0.0
    %1538 = vmatpush.xpose.msra.mxu0 0.0
    %1539 = vmatpush.xpose.msra.mxu0 0.0
    %1540 = vmatpush.xpose.msra.mxu0 0.0
    %1541 = vmatpush.xpose.msra.mxu0 0.0
    %1542 = vmatpush.xpose.msra.mxu0 0.0
    %1543 = vmatpush.xpose.msra.mxu0 0.0
    %1544 = vmatpush.xpose.msra.mxu0 0.0
    %1545 = vmatpush.xpose.msra.mxu0 0.0
    %1546 = vmatpush.xpose.msra.mxu0 %v479
    %1547 = vmatmul.f32.gmra.mxu0 %v200
    %v1548 = vpop.f32.mrf.mxu0
    %v1549 = vadd.f32 %v1529, %v1548
    %1550 = vdwg.mxu0
    %1551 = vmatpush.xpose.msra.mxu0 0.0
    %1552 = vmatpush.xpose.msra.mxu0 0.0
    %1553 = vmatpush.xpose.msra.mxu0 0.0
    %1554 = vmatpush.xpose.msra.mxu0 0.0
    %1555 = vmatpush.xpose.msra.mxu0 0.0
    %1556 = vmatpush.xpose.msra.mxu0 0.0
    %1557 = vmatpush.xpose.msra.mxu0 0.0
    %1558 = vmatpush.xpose.msra.mxu0 0.0
    %1559 = vmatpush.xpose.msra.mxu0 0.0
    %1560 = vmatpush.xpose.msra.mxu0 0.0
    %1561 = vmatpush.xpose.msra.mxu0 0.0
    %1562 = vmatpush.xpose.msra.mxu0 0.0
    %1563 = vmatpush.xpose.msra.mxu0 0.0
    %1564 = vmatpush.xpose.msra.mxu0 0.0
    %1565 = vmatpush.xpose.msra.mxu0 0.0
    %1566 = vmatpush.xpose.msra.mxu0 %v480
    %1567 = vmatmul.f32.gmra.mxu0 %v201
    %v1568 = vpop.f32.mrf.mxu0
    %v1569 = vadd.f32 %v1549, %v1568
    %1570 = vdwg.mxu0
    %1571 = vmatpush.xpose.msra.mxu0 0.0
    %1572 = vmatpush.xpose.msra.mxu0 0.0
    %1573 = vmatpush.xpose.msra.mxu0 0.0
    %1574 = vmatpush.xpose.msra.mxu0 0.0
    %1575 = vmatpush.xpose.msra.mxu0 0.0
    %1576 = vmatpush.xpose.msra.mxu0 0.0
    %1577 = vmatpush.xpose.msra.mxu0 0.0
    %1578 = vmatpush.xpose.msra.mxu0 0.0
    %1579 = vmatpush.xpose.msra.mxu0 0.0
    %1580 = vmatpush.xpose.msra.mxu0 0.0
    %1581 = vmatpush.xpose.msra.mxu0 0.0
    %1582 = vmatpush.xpose.msra.mxu0 0.0
    %1583 = vmatpush.xpose.msra.mxu0 0.0
    %1584 = vmatpush.xpose.msra.mxu0 0.0
    %1585 = vmatpush.xpose.msra.mxu0 0.0
    %1586 = vmatpush.xpose.msra.mxu0 %v481
    %1587 = vmatmul.f32.gmra.mxu0 %v202
    %v1588 = vpop.f32.mrf.mxu0
    %v1589 = vadd.f32 %v1569, %v1588
    %1590 = vdwg.mxu0
    %1591 = vmatpush.xpose.msra.mxu0 0.0
    %1592 = vmatpush.xpose.msra.mxu0 0.0
    %1593 = vmatpush.xpose.msra.mxu0 0.0
    %1594 = vmatpush.xpose.msra.mxu0 0.0
    %1595 = vmatpush.xpose.msra.mxu0 0.0
    %1596 = vmatpush.xpose.msra.mxu0 0.0
    %1597 = vmatpush.xpose.msra.mxu0 0.0
    %1598 = vmatpush.xpose.msra.mxu0 0.0
    %1599 = vmatpush.xpose.msra.mxu0 0.0
    %1600 = vmatpush.xpose.msra.mxu0 0.0
    %1601 = vmatpush.xpose.msra.mxu0 0.0
    %1602 = vmatpush.xpose.msra.mxu0 0.0
    %1603 = vmatpush.xpose.msra.mxu0 0.0
    %1604 = vmatpush.xpose.msra.mxu0 0.0
    %1605 = vmatpush.xpose.msra.mxu0 0.0
    %1606 = vmatpush.xpose.msra.mxu0 %v482
    %1607 = vmatmul.f32.gmra.mxu0 %v203
    %v1608 = vpop.f32.mrf.mxu0
    %v1609 = vadd.f32 %v1589, %v1608
    %1610 = vdwg.mxu0
    %1611 = vmatpush.xpose.msra.mxu0 0.0
    %1612 = vmatpush.xpose.msra.mxu0 0.0
    %1613 = vmatpush.xpose.msra.mxu0 0.0
    %1614 = vmatpush.xpose.msra.mxu0 0.0
    %1615 = vmatpush.xpose.msra.mxu0 0.0
    %1616 = vmatpush.xpose.msra.mxu0 0.0
    %1617 = vmatpush.xpose.msra.mxu0 0.0
    %1618 = vmatpush.xpose.msra.mxu0 0.0
    %1619 = vmatpush.xpose.msra.mxu0 0.0
    %1620 = vmatpush.xpose.msra.mxu0 0.0
    %1621 = vmatpush.xpose.msra.mxu0 0.0
    %1622 = vmatpush.xpose.msra.mxu0 0.0
    %1623 = vmatpush.xpose.msra.mxu0 0.0
    %1624 = vmatpush.xpose.msra.mxu0 0.0
    %1625 = vmatpush.xpose.msra.mxu0 0.0
    %1626 = vmatpush.xpose.msra.mxu0 %v487
    %1627 = vmatmul.f32.gmra.mxu0 %v206
    %v1628 = vpop.f32.mrf.mxu0
    %v1629 = vadd.f32 %v1609, %v1628
    %1630 = vdwg.mxu0
    %1631 = vmatpush.xpose.msra.mxu0 0.0
    %1632 = vmatpush.xpose.msra.mxu0 0.0
    %1633 = vmatpush.xpose.msra.mxu0 0.0
    %1634 = vmatpush.xpose.msra.mxu0 0.0
    %1635 = vmatpush.xpose.msra.mxu0 0.0
    %1636 = vmatpush.xpose.msra.mxu0 0.0
    %1637 = vmatpush.xpose.msra.mxu0 0.0
    %1638 = vmatpush.xpose.msra.mxu0 0.0
    %1639 = vmatpush.xpose.msra.mxu0 0.0
    %1640 = vmatpush.xpose.msra.mxu0 0.0
    %1641 = vmatpush.xpose.msra.mxu0 0.0
    %1642 = vmatpush.xpose.msra.mxu0 0.0
    %1643 = vmatpush.xpose.msra.mxu0 0.0
    %1644 = vmatpush.xpose.msra.mxu0 0.0
    %1645 = vmatpush.xpose.msra.mxu0 0.0
    %1646 = vmatpush.xpose.msra.mxu0 %v488
    %1647 = vmatmul.f32.gmra.mxu0 %v207
    %v1648 = vpop.f32.mrf.mxu0
    %v1649 = vadd.f32 %v1629, %v1648
    %1650 = vdwg.mxu0
    %1651 = vmatpush.xpose.msra.mxu0 0.0
    %1652 = vmatpush.xpose.msra.mxu0 0.0
    %1653 = vmatpush.xpose.msra.mxu0 0.0
    %1654 = vmatpush.xpose.msra.mxu0 0.0
    %1655 = vmatpush.xpose.msra.mxu0 0.0
    %1656 = vmatpush.xpose.msra.mxu0 0.0
    %1657 = vmatpush.xpose.msra.mxu0 0.0
    %1658 = vmatpush.xpose.msra.mxu0 0.0
    %1659 = vmatpush.xpose.msra.mxu0 0.0
    %1660 = vmatpush.xpose.msra.mxu0 0.0
    %1661 = vmatpush.xpose.msra.mxu0 0.0
    %1662 = vmatpush.xpose.msra.mxu0 0.0
    %1663 = vmatpush.xpose.msra.mxu0 0.0
    %1664 = vmatpush.xpose.msra.mxu0 0.0
    %1665 = vmatpush.xpose.msra.mxu0 0.0
    %1666 = vmatpush.xpose.msra.mxu0 %v489
    %1667 = vmatmul.f32.gmra.mxu0 %v208
    %v1668 = vpop.f32.mrf.mxu0
    %v1669 = vadd.f32 %v1649, %v1668
    %1670 = vdwg.mxu0
    %1671 = vmatpush.xpose.msra.mxu0 0.0
    %1672 = vmatpush.xpose.msra.mxu0 0.0
    %1673 = vmatpush.xpose.msra.mxu0 0.0
    %1674 = vmatpush.xpose.msra.mxu0 0.0
    %1675 = vmatpush.xpose.msra.mxu0 0.0
    %1676 = vmatpush.xpose.msra.mxu0 0.0
    %1677 = vmatpush.xpose.msra.mxu0 0.0
    %1678 = vmatpush.xpose.msra.mxu0 0.0
    %1679 = vmatpush.xpose.msra.mxu0 0.0
    %1680 = vmatpush.xpose.msra.mxu0 0.0
    %1681 = vmatpush.xpose.msra.mxu0 0.0
    %1682 = vmatpush.xpose.msra.mxu0 0.0
    %1683 = vmatpush.xpose.msra.mxu0 0.0
    %1684 = vmatpush.xpose.msra.mxu0 0.0
    %1685 = vmatpush.xpose.msra.mxu0 0.0
    %1686 = vmatpush.xpose.msra.mxu0 %v490
    %1687 = vmatmul.f32.gmra.mxu0 %v209
    %v1688 = vpop.f32.mrf.mxu0
    %v1689 = vadd.f32 %v1669, %v1688
    %1690 = vdwg.mxu0
    %1691 = vmatpush.xpose.msra.mxu0 0.0
    %1692 = vmatpush.xpose.msra.mxu0 0.0
    %1693 = vmatpush.xpose.msra.mxu0 0.0
    %1694 = vmatpush.xpose.msra.mxu0 0.0
    %1695 = vmatpush.xpose.msra.mxu0 0.0
    %1696 = vmatpush.xpose.msra.mxu0 0.0
    %1697 = vmatpush.xpose.msra.mxu0 0.0
    %1698 = vmatpush.xpose.msra.mxu0 0.0
    %1699 = vmatpush.xpose.msra.mxu0 0.0
    %1700 = vmatpush.xpose.msra.mxu0 0.0
    %1701 = vmatpush.xpose.msra.mxu0 0.0
    %1702 = vmatpush.xpose.msra.mxu0 0.0
    %1703 = vmatpush.xpose.msra.mxu0 0.0
    %1704 = vmatpush.xpose.msra.mxu0 0.0
    %1705 = vmatpush.xpose.msra.mxu0 0.0
    %1706 = vmatpush.xpose.msra.mxu0 %v491
    %1707 = vmatmul.f32.gmra.mxu0 %v210
    %v1708 = vpop.f32.mrf.mxu0
    %v1709 = vadd.f32 %v1689, %v1708
    %1710 = vdwg.mxu0
    %1711 = vmatpush.xpose.msra.mxu0 0.0
    %1712 = vmatpush.xpose.msra.mxu0 0.0
    %1713 = vmatpush.xpose.msra.mxu0 0.0
    %1714 = vmatpush.xpose.msra.mxu0 0.0
    %1715 = vmatpush.xpose.msra.mxu0 0.0
    %1716 = vmatpush.xpose.msra.mxu0 0.0
    %1717 = vmatpush.xpose.msra.mxu0 0.0
    %1718 = vmatpush.xpose.msra.mxu0 0.0
    %1719 = vmatpush.xpose.msra.mxu0 0.0
    %1720 = vmatpush.xpose.msra.mxu0 0.0
    %1721 = vmatpush.xpose.msra.mxu0 0.0
    %1722 = vmatpush.xpose.msra.mxu0 0.0
    %1723 = vmatpush.xpose.msra.mxu0 0.0
    %1724 = vmatpush.xpose.msra.mxu0 0.0
    %1725 = vmatpush.xpose.msra.mxu0 0.0
    %1726 = vmatpush.xpose.msra.mxu0 %v492
    %1727 = vmatmul.f32.gmra.mxu0 %v211
    %v1728 = vpop.f32.mrf.mxu0
    %v1729 = vadd.f32 %v1709, %v1728
    %1730 = vdwg.mxu0
    %1731 = vmatpush.xpose.msra.mxu0 0.0
    %1732 = vmatpush.xpose.msra.mxu0 0.0
    %1733 = vmatpush.xpose.msra.mxu0 0.0
    %1734 = vmatpush.xpose.msra.mxu0 0.0
    %1735 = vmatpush.xpose.msra.mxu0 0.0
    %1736 = vmatpush.xpose.msra.mxu0 0.0
    %1737 = vmatpush.xpose.msra.mxu0 0.0
    %1738 = vmatpush.xpose.msra.mxu0 0.0
    %1739 = vmatpush.xpose.msra.mxu0 0.0
    %1740 = vmatpush.xpose.msra.mxu0 0.0
    %1741 = vmatpush.xpose.msra.mxu0 0.0
    %1742 = vmatpush.xpose.msra.mxu0 0.0
    %1743 = vmatpush.xpose.msra.mxu0 0.0
    %1744 = vmatpush.xpose.msra.mxu0 0.0
    %1745 = vmatpush.xpose.msra.mxu0 0.0
    %1746 = vmatpush.xpose.msra.mxu0 %v493
    %1747 = vmatmul.f32.gmra.mxu0 %v212
    %v1748 = vpop.f32.mrf.mxu0
    %v1749 = vadd.f32 %v1729, %v1748
    %1750 = vdwg.mxu0
    %1751 = vmatpush.xpose.msra.mxu0 0.0
    %1752 = vmatpush.xpose.msra.mxu0 0.0
    %1753 = vmatpush.xpose.msra.mxu0 0.0
    %1754 = vmatpush.xpose.msra.mxu0 0.0
    %1755 = vmatpush.xpose.msra.mxu0 0.0
    %1756 = vmatpush.xpose.msra.mxu0 0.0
    %1757 = vmatpush.xpose.msra.mxu0 0.0
    %1758 = vmatpush.xpose.msra.mxu0 0.0
    %1759 = vmatpush.xpose.msra.mxu0 0.0
    %1760 = vmatpush.xpose.msra.mxu0 0.0
    %1761 = vmatpush.xpose.msra.mxu0 0.0
    %1762 = vmatpush.xpose.msra.mxu0 0.0
    %1763 = vmatpush.xpose.msra.mxu0 0.0
    %1764 = vmatpush.xpose.msra.mxu0 0.0
    %1765 = vmatpush.xpose.msra.mxu0 0.0
    %1766 = vmatpush.xpose.msra.mxu0 %v494
    %1767 = vmatmul.f32.gmra.mxu0 %v213
    %v1768 = vpop.f32.mrf.mxu0
    %v1769 = vadd.f32 %v1749, %v1768
    %1770 = vdwg.mxu0
    %1771 = vmatpush.xpose.msra.mxu0 0.0
    %1772 = vmatpush.xpose.msra.mxu0 0.0
    %1773 = vmatpush.xpose.msra.mxu0 0.0
    %1774 = vmatpush.xpose.msra.mxu0 0.0
    %1775 = vmatpush.xpose.msra.mxu0 0.0
    %1776 = vmatpush.xpose.msra.mxu0 0.0
    %1777 = vmatpush.xpose.msra.mxu0 0.0
    %1778 = vmatpush.xpose.msra.mxu0 0.0
    %1779 = vmatpush.xpose.msra.mxu0 0.0
    %1780 = vmatpush.xpose.msra.mxu0 0.0
    %1781 = vmatpush.xpose.msra.mxu0 0.0
    %1782 = vmatpush.xpose.msra.mxu0 0.0
    %1783 = vmatpush.xpose.msra.mxu0 0.0
    %1784 = vmatpush.xpose.msra.mxu0 0.0
    %1785 = vmatpush.xpose.msra.mxu0 0.0
    %1786 = vmatpush.xpose.msra.mxu0 %v499
    %1787 = vmatmul.f32.gmra.mxu0 %v216
    %v1788 = vpop.f32.mrf.mxu0
    %v1789 = vadd.f32 %v1769, %v1788
    %1790 = vdwg.mxu0
    %1791 = vmatpush.xpose.msra.mxu0 0.0
    %1792 = vmatpush.xpose.msra.mxu0 0.0
    %1793 = vmatpush.xpose.msra.mxu0 0.0
    %1794 = vmatpush.xpose.msra.mxu0 0.0
    %1795 = vmatpush.xpose.msra.mxu0 0.0
    %1796 = vmatpush.xpose.msra.mxu0 0.0
    %1797 = vmatpush.xpose.msra.mxu0 0.0
    %1798 = vmatpush.xpose.msra.mxu0 0.0
    %1799 = vmatpush.xpose.msra.mxu0 0.0
    %1800 = vmatpush.xpose.msra.mxu0 0.0
    %1801 = vmatpush.xpose.msra.mxu0 0.0
    %1802 = vmatpush.xpose.msra.mxu0 0.0
    %1803 = vmatpush.xpose.msra.mxu0 0.0
    %1804 = vmatpush.xpose.msra.mxu0 0.0
    %1805 = vmatpush.xpose.msra.mxu0 0.0
    %1806 = vmatpush.xpose.msra.mxu0 %v500
    %1807 = vmatmul.f32.gmra.mxu0 %v217
    %v1808 = vpop.f32.mrf.mxu0
    %v1809 = vadd.f32 %v1789, %v1808
    %1810 = vdwg.mxu0
    %1811 = vmatpush.xpose.msra.mxu0 0.0
    %1812 = vmatpush.xpose.msra.mxu0 0.0
    %1813 = vmatpush.xpose.msra.mxu0 0.0
    %1814 = vmatpush.xpose.msra.mxu0 0.0
    %1815 = vmatpush.xpose.msra.mxu0 0.0
    %1816 = vmatpush.xpose.msra.mxu0 0.0
    %1817 = vmatpush.xpose.msra.mxu0 0.0
    %1818 = vmatpush.xpose.msra.mxu0 0.0
    %1819 = vmatpush.xpose.msra.mxu0 0.0
    %1820 = vmatpush.xpose.msra.mxu0 0.0
    %1821 = vmatpush.xpose.msra.mxu0 0.0
    %1822 = vmatpush.xpose.msra.mxu0 0.0
    %1823 = vmatpush.xpose.msra.mxu0 0.0
    %1824 = vmatpush.xpose.msra.mxu0 0.0
    %1825 = vmatpush.xpose.msra.mxu0 0.0
    %1826 = vmatpush.xpose.msra.mxu0 %v501
    %1827 = vmatmul.f32.gmra.mxu0 %v218
    %v1828 = vpop.f32.mrf.mxu0
    %v1829 = vadd.f32 %v1809, %v1828
    %1830 = vdwg.mxu0
    %1831 = vmatpush.xpose.msra.mxu0 0.0
    %1832 = vmatpush.xpose.msra.mxu0 0.0
    %1833 = vmatpush.xpose.msra.mxu0 0.0
    %1834 = vmatpush.xpose.msra.mxu0 0.0
    %1835 = vmatpush.xpose.msra.mxu0 0.0
    %1836 = vmatpush.xpose.msra.mxu0 0.0
    %1837 = vmatpush.xpose.msra.mxu0 0.0
    %1838 = vmatpush.xpose.msra.mxu0 0.0
    %1839 = vmatpush.xpose.msra.mxu0 0.0
    %1840 = vmatpush.xpose.msra.mxu0 0.0
    %1841 = vmatpush.xpose.msra.mxu0 0.0
    %1842 = vmatpush.xpose.msra.mxu0 0.0
    %1843 = vmatpush.xpose.msra.mxu0 0.0
    %1844 = vmatpush.xpose.msra.mxu0 0.0
    %1845 = vmatpush.xpose.msra.mxu0 0.0
    %1846 = vmatpush.xpose.msra.mxu0 %v502
    %1847 = vmatmul.f32.gmra.mxu0 %v219
    %v1848 = vpop.f32.mrf.mxu0
    %v1849 = vadd.f32 %v1829, %v1848
    %1850 = vdwg.mxu0
    %1851 = vmatpush.xpose.msra.mxu0 0.0
    %1852 = vmatpush.xpose.msra.mxu0 0.0
    %1853 = vmatpush.xpose.msra.mxu0 0.0
    %1854 = vmatpush.xpose.msra.mxu0 0.0
    %1855 = vmatpush.xpose.msra.mxu0 0.0
    %1856 = vmatpush.xpose.msra.mxu0 0.0
    %1857 = vmatpush.xpose.msra.mxu0 0.0
    %1858 = vmatpush.xpose.msra.mxu0 0.0
    %1859 = vmatpush.xpose.msra.mxu0 0.0
    %1860 = vmatpush.xpose.msra.mxu0 0.0
    %1861 = vmatpush.xpose.msra.mxu0 0.0
    %1862 = vmatpush.xpose.msra.mxu0 0.0
    %1863 = vmatpush.xpose.msra.mxu0 0.0
    %1864 = vmatpush.xpose.msra.mxu0 0.0
    %1865 = vmatpush.xpose.msra.mxu0 0.0
    %1866 = vmatpush.xpose.msra.mxu0 %v503
    %1867 = vmatmul.f32.gmra.mxu0 %v220
    %v1868 = vpop.f32.mrf.mxu0
    %v1869 = vadd.f32 %v1849, %v1868
    %1870 = vdwg.mxu0
    %1871 = vmatpush.xpose.msra.mxu0 0.0
    %1872 = vmatpush.xpose.msra.mxu0 0.0
    %1873 = vmatpush.xpose.msra.mxu0 0.0
    %1874 = vmatpush.xpose.msra.mxu0 0.0
    %1875 = vmatpush.xpose.msra.mxu0 0.0
    %1876 = vmatpush.xpose.msra.mxu0 0.0
    %1877 = vmatpush.xpose.msra.mxu0 0.0
    %1878 = vmatpush.xpose.msra.mxu0 0.0
    %1879 = vmatpush.xpose.msra.mxu0 0.0
    %1880 = vmatpush.xpose.msra.mxu0 0.0
    %1881 = vmatpush.xpose.msra.mxu0 0.0
    %1882 = vmatpush.xpose.msra.mxu0 0.0
    %1883 = vmatpush.xpose.msra.mxu0 0.0
    %1884 = vmatpush.xpose.msra.mxu0 0.0
    %1885 = vmatpush.xpose.msra.mxu0 0.0
    %1886 = vmatpush.xpose.msra.mxu0 %v504
    %1887 = vmatmul.f32.gmra.mxu0 %v221
    %v1888 = vpop.f32.mrf.mxu0
    %v1889 = vadd.f32 %v1869, %v1888
    %1890 = vdwg.mxu0
    %1891 = vmatpush.xpose.msra.mxu0 0.0
    %1892 = vmatpush.xpose.msra.mxu0 0.0
    %1893 = vmatpush.xpose.msra.mxu0 0.0
    %1894 = vmatpush.xpose.msra.mxu0 0.0
    %1895 = vmatpush.xpose.msra.mxu0 0.0
    %1896 = vmatpush.xpose.msra.mxu0 0.0
    %1897 = vmatpush.xpose.msra.mxu0 0.0
    %1898 = vmatpush.xpose.msra.mxu0 0.0
    %1899 = vmatpush.xpose.msra.mxu0 0.0
    %1900 = vmatpush.xpose.msra.mxu0 0.0
    %1901 = vmatpush.xpose.msra.mxu0 0.0
    %1902 = vmatpush.xpose.msra.mxu0 0.0
    %1903 = vmatpush.xpose.msra.mxu0 0.0
    %1904 = vmatpush.xpose.msra.mxu0 0.0
    %1905 = vmatpush.xpose.msra.mxu0 0.0
    %1906 = vmatpush.xpose.msra.mxu0 %v505
    %1907 = vmatmul.f32.gmra.mxu0 %v222
    %v1908 = vpop.f32.mrf.mxu0
    %v1909 = vadd.f32 %v1889, %v1908
    %1910 = vdwg.mxu0
    %1911 = vmatpush.xpose.msra.mxu0 0.0
    %1912 = vmatpush.xpose.msra.mxu0 0.0
    %1913 = vmatpush.xpose.msra.mxu0 0.0
    %1914 = vmatpush.xpose.msra.mxu0 0.0
    %1915 = vmatpush.xpose.msra.mxu0 0.0
    %1916 = vmatpush.xpose.msra.mxu0 0.0
    %1917 = vmatpush.xpose.msra.mxu0 0.0
    %1918 = vmatpush.xpose.msra.mxu0 0.0
    %1919 = vmatpush.xpose.msra.mxu0 0.0
    %1920 = vmatpush.xpose.msra.mxu0 0.0
    %1921 = vmatpush.xpose.msra.mxu0 0.0
    %1922 = vmatpush.xpose.msra.mxu0 0.0
    %1923 = vmatpush.xpose.msra.mxu0 0.0
    %1924 = vmatpush.xpose.msra.mxu0 0.0
    %1925 = vmatpush.xpose.msra.mxu0 0.0
    %1926 = vmatpush.xpose.msra.mxu0 %v506
    %1927 = vmatmul.f32.gmra.mxu0 %v223
    %v1928 = vpop.f32.mrf.mxu0
    %v1929 = vadd.f32 %v1909, %v1928
    %1930 = vdwg.mxu0
    %1931 = vmatpush.xpose.msra.mxu0 0.0
    %1932 = vmatpush.xpose.msra.mxu0 0.0
    %1933 = vmatpush.xpose.msra.mxu0 0.0
    %1934 = vmatpush.xpose.msra.mxu0 0.0
    %1935 = vmatpush.xpose.msra.mxu0 0.0
    %1936 = vmatpush.xpose.msra.mxu0 0.0
    %1937 = vmatpush.xpose.msra.mxu0 0.0
    %1938 = vmatpush.xpose.msra.mxu0 0.0
    %1939 = vmatpush.xpose.msra.mxu0 0.0
    %1940 = vmatpush.xpose.msra.mxu0 0.0
    %1941 = vmatpush.xpose.msra.mxu0 0.0
    %1942 = vmatpush.xpose.msra.mxu0 0.0
    %1943 = vmatpush.xpose.msra.mxu0 0.0
    %1944 = vmatpush.xpose.msra.mxu0 0.0
    %1945 = vmatpush.xpose.msra.mxu0 0.0
    %1946 = vmatpush.xpose.msra.mxu0 %v511
    %1947 = vmatmul.f32.gmra.mxu0 %v226
    %v1948 = vpop.f32.mrf.mxu0
    %v1949 = vadd.f32 %v1929, %v1948
    %1950 = vdwg.mxu0
    %1951 = vmatpush.xpose.msra.mxu0 0.0
    %1952 = vmatpush.xpose.msra.mxu0 0.0
    %1953 = vmatpush.xpose.msra.mxu0 0.0
    %1954 = vmatpush.xpose.msra.mxu0 0.0
    %1955 = vmatpush.xpose.msra.mxu0 0.0
    %1956 = vmatpush.xpose.msra.mxu0 0.0
    %1957 = vmatpush.xpose.msra.mxu0 0.0
    %1958 = vmatpush.xpose.msra.mxu0 0.0
    %1959 = vmatpush.xpose.msra.mxu0 0.0
    %1960 = vmatpush.xpose.msra.mxu0 0.0
    %1961 = vmatpush.xpose.msra.mxu0 0.0
    %1962 = vmatpush.xpose.msra.mxu0 0.0
    %1963 = vmatpush.xpose.msra.mxu0 0.0
    %1964 = vmatpush.xpose.msra.mxu0 0.0
    %1965 = vmatpush.xpose.msra.mxu0 0.0
    %1966 = vmatpush.xpose.msra.mxu0 %v512
    %1967 = vmatmul.f32.gmra.mxu0 %v227
    %v1968 = vpop.f32.mrf.mxu0
    %v1969 = vadd.f32 %v1949, %v1968
    %1970 = vdwg.mxu0
    %1971 = vmatpush.xpose.msra.mxu0 0.0
    %1972 = vmatpush.xpose.msra.mxu0 0.0
    %1973 = vmatpush.xpose.msra.mxu0 0.0
    %1974 = vmatpush.xpose.msra.mxu0 0.0
    %1975 = vmatpush.xpose.msra.mxu0 0.0
    %1976 = vmatpush.xpose.msra.mxu0 0.0
    %1977 = vmatpush.xpose.msra.mxu0 0.0
    %1978 = vmatpush.xpose.msra.mxu0 0.0
    %1979 = vmatpush.xpose.msra.mxu0 0.0
    %1980 = vmatpush.xpose.msra.mxu0 0.0
    %1981 = vmatpush.xpose.msra.mxu0 0.0
    %1982 = vmatpush.xpose.msra.mxu0 0.0
    %1983 = vmatpush.xpose.msra.mxu0 0.0
    %1984 = vmatpush.xpose.msra.mxu0 0.0
    %1985 = vmatpush.xpose.msra.mxu0 0.0
    %1986 = vmatpush.xpose.msra.mxu0 %v513
    %1987 = vmatmul.f32.gmra.mxu0 %v228
    %v1988 = vpop.f32.mrf.mxu0
    %v1989 = vadd.f32 %v1969, %v1988
    %1990 = vdwg.mxu0
    %1991 = vmatpush.xpose.msra.mxu0 0.0
    %1992 = vmatpush.xpose.msra.mxu0 0.0
    %1993 = vmatpush.xpose.msra.mxu0 0.0
    %1994 = vmatpush.xpose.msra.mxu0 0.0
    %1995 = vmatpush.xpose.msra.mxu0 0.0
    %1996 = vmatpush.xpose.msra.mxu0 0.0
    %1997 = vmatpush.xpose.msra.mxu0 0.0
    %1998 = vmatpush.xpose.msra.mxu0 0.0
    %1999 = vmatpush.xpose.msra.mxu0 0.0
    %2000 = vmatpush.xpose.msra.mxu0 0.0
    %2001 = vmatpush.xpose.msra.mxu0 0.0
    %2002 = vmatpush.xpose.msra.mxu0 0.0
    %2003 = vmatpush.xpose.msra.mxu0 0.0
    %2004 = vmatpush.xpose.msra.mxu0 0.0
    %2005 = vmatpush.xpose.msra.mxu0 0.0
    %2006 = vmatpush.xpose.msra.mxu0 %v514
    %2007 = vmatmul.f32.gmra.mxu0 %v229
    %v2008 = vpop.f32.mrf.mxu0
    %v2009 = vadd.f32 %v1989, %v2008
    %2010 = vdwg.mxu0
    %2011 = vmatpush.xpose.msra.mxu0 0.0
    %2012 = vmatpush.xpose.msra.mxu0 0.0
    %2013 = vmatpush.xpose.msra.mxu0 0.0
    %2014 = vmatpush.xpose.msra.mxu0 0.0
    %2015 = vmatpush.xpose.msra.mxu0 0.0
    %2016 = vmatpush.xpose.msra.mxu0 0.0
    %2017 = vmatpush.xpose.msra.mxu0 0.0
    %2018 = vmatpush.xpose.msra.mxu0 0.0
    %2019 = vmatpush.xpose.msra.mxu0 0.0
    %2020 = vmatpush.xpose.msra.mxu0 0.0
    %2021 = vmatpush.xpose.msra.mxu0 0.0
    %2022 = vmatpush.xpose.msra.mxu0 0.0
    %2023 = vmatpush.xpose.msra.mxu0 0.0
    %2024 = vmatpush.xpose.msra.mxu0 0.0
    %2025 = vmatpush.xpose.msra.mxu0 0.0
    %2026 = vmatpush.xpose.msra.mxu0 %v515
    %2027 = vmatmul.f32.gmra.mxu0 %v230
    %v2028 = vpop.f32.mrf.mxu0
    %v2029 = vadd.f32 %v2009, %v2028
    %2030 = vdwg.mxu0
    %2031 = vmatpush.xpose.msra.mxu0 0.0
    %2032 = vmatpush.xpose.msra.mxu0 0.0
    %2033 = vmatpush.xpose.msra.mxu0 0.0
    %2034 = vmatpush.xpose.msra.mxu0 0.0
    %2035 = vmatpush.xpose.msra.mxu0 0.0
    %2036 = vmatpush.xpose.msra.mxu0 0.0
    %2037 = vmatpush.xpose.msra.mxu0 0.0
    %2038 = vmatpush.xpose.msra.mxu0 0.0
    %2039 = vmatpush.xpose.msra.mxu0 0.0
    %2040 = vmatpush.xpose.msra.mxu0 0.0
    %2041 = vmatpush.xpose.msra.mxu0 0.0
    %2042 = vmatpush.xpose.msra.mxu0 0.0
    %2043 = vmatpush.xpose.msra.mxu0 0.0
    %2044 = vmatpush.xpose.msra.mxu0 0.0
    %2045 = vmatpush.xpose.msra.mxu0 0.0
    %2046 = vmatpush.xpose.msra.mxu0 %v516
    %2047 = vmatmul.f32.gmra.mxu0 %v231
    %v2048 = vpop.f32.mrf.mxu0
    %v2049 = vadd.f32 %v2029, %v2048
    %2050 = vdwg.mxu0
    %2051 = vmatpush.xpose.msra.mxu0 0.0
    %2052 = vmatpush.xpose.msra.mxu0 0.0
    %2053 = vmatpush.xpose.msra.mxu0 0.0
    %2054 = vmatpush.xpose.msra.mxu0 0.0
    %2055 = vmatpush.xpose.msra.mxu0 0.0
    %2056 = vmatpush.xpose.msra.mxu0 0.0
    %2057 = vmatpush.xpose.msra.mxu0 0.0
    %2058 = vmatpush.xpose.msra.mxu0 0.0
    %2059 = vmatpush.xpose.msra.mxu0 0.0
    %2060 = vmatpush.xpose.msra.mxu0 0.0
    %2061 = vmatpush.xpose.msra.mxu0 0.0
    %2062 = vmatpush.xpose.msra.mxu0 0.0
    %2063 = vmatpush.xpose.msra.mxu0 0.0
    %2064 = vmatpush.xpose.msra.mxu0 0.0
    %2065 = vmatpush.xpose.msra.mxu0 0.0
    %2066 = vmatpush.xpose.msra.mxu0 %v517
    %2067 = vmatmul.f32.gmra.mxu0 %v232
    %v2068 = vpop.f32.mrf.mxu0
    %v2069 = vadd.f32 %v2049, %v2068
    %2070 = vdwg.mxu0
    %2071 = vmatpush.xpose.msra.mxu0 0.0
    %2072 = vmatpush.xpose.msra.mxu0 0.0
    %2073 = vmatpush.xpose.msra.mxu0 0.0
    %2074 = vmatpush.xpose.msra.mxu0 0.0
    %2075 = vmatpush.xpose.msra.mxu0 0.0
    %2076 = vmatpush.xpose.msra.mxu0 0.0
    %2077 = vmatpush.xpose.msra.mxu0 0.0
    %2078 = vmatpush.xpose.msra.mxu0 0.0
    %2079 = vmatpush.xpose.msra.mxu0 0.0
    %2080 = vmatpush.xpose.msra.mxu0 0.0
    %2081 = vmatpush.xpose.msra.mxu0 0.0
    %2082 = vmatpush.xpose.msra.mxu0 0.0
    %2083 = vmatpush.xpose.msra.mxu0 0.0
    %2084 = vmatpush.xpose.msra.mxu0 0.0
    %2085 = vmatpush.xpose.msra.mxu0 0.0
    %2086 = vmatpush.xpose.msra.mxu0 %v518
    %2087 = vmatmul.f32.gmra.mxu0 %v233
    %v2088 = vpop.f32.mrf.mxu0
    %v2089 = vadd.f32 %v2069, %v2088
    %2090 = vdwg.mxu0
    %2091 = vmatpush.xpose.msra.mxu0 0.0
    %2092 = vmatpush.xpose.msra.mxu0 0.0
    %2093 = vmatpush.xpose.msra.mxu0 0.0
    %2094 = vmatpush.xpose.msra.mxu0 0.0
    %2095 = vmatpush.xpose.msra.mxu0 0.0
    %2096 = vmatpush.xpose.msra.mxu0 0.0
    %2097 = vmatpush.xpose.msra.mxu0 0.0
    %2098 = vmatpush.xpose.msra.mxu0 0.0
    %2099 = vmatpush.xpose.msra.mxu0 0.0
    %2100 = vmatpush.xpose.msra.mxu0 0.0
    %2101 = vmatpush.xpose.msra.mxu0 0.0
    %2102 = vmatpush.xpose.msra.mxu0 0.0
    %2103 = vmatpush.xpose.msra.mxu0 0.0
    %2104 = vmatpush.xpose.msra.mxu0 0.0
    %2105 = vmatpush.xpose.msra.mxu0 0.0
    %2106 = vmatpush.xpose.msra.mxu0 %v523
    %2107 = vmatmul.f32.gmra.mxu0 %v236
    %v2108 = vpop.f32.mrf.mxu0
    %v2109 = vadd.f32 %v2089, %v2108
    %2110 = vdwg.mxu0
    %2111 = vmatpush.xpose.msra.mxu0 0.0
    %2112 = vmatpush.xpose.msra.mxu0 0.0
    %2113 = vmatpush.xpose.msra.mxu0 0.0
    %2114 = vmatpush.xpose.msra.mxu0 0.0
    %2115 = vmatpush.xpose.msra.mxu0 0.0
    %2116 = vmatpush.xpose.msra.mxu0 0.0
    %2117 = vmatpush.xpose.msra.mxu0 0.0
    %2118 = vmatpush.xpose.msra.mxu0 0.0
    %2119 = vmatpush.xpose.msra.mxu0 0.0
    %2120 = vmatpush.xpose.msra.mxu0 0.0
    %2121 = vmatpush.xpose.msra.mxu0 0.0
    %2122 = vmatpush.xpose.msra.mxu0 0.0
    %2123 = vmatpush.xpose.msra.mxu0 0.0
    %2124 = vmatpush.xpose.msra.mxu0 0.0
    %2125 = vmatpush.xpose.msra.mxu0 0.0
    %2126 = vmatpush.xpose.msra.mxu0 %v524
    %2127 = vmatmul.f32.gmra.mxu0 %v237
    %v2128 = vpop.f32.mrf.mxu0
    %v2129 = vadd.f32 %v2109, %v2128
    %2130 = vdwg.mxu0
    %2131 = vmatpush.xpose.msra.mxu0 0.0
    %2132 = vmatpush.xpose.msra.mxu0 0.0
    %2133 = vmatpush.xpose.msra.mxu0 0.0
    %2134 = vmatpush.xpose.msra.mxu0 0.0
    %2135 = vmatpush.xpose.msra.mxu0 0.0
    %2136 = vmatpush.xpose.msra.mxu0 0.0
    %2137 = vmatpush.xpose.msra.mxu0 0.0
    %2138 = vmatpush.xpose.msra.mxu0 0.0
    %2139 = vmatpush.xpose.msra.mxu0 0.0
    %2140 = vmatpush.xpose.msra.mxu0 0.0
    %2141 = vmatpush.xpose.msra.mxu0 0.0
    %2142 = vmatpush.xpose.msra.mxu0 0.0
    %2143 = vmatpush.xpose.msra.mxu0 0.0
    %2144 = vmatpush.xpose.msra.mxu0 0.0
    %2145 = vmatpush.xpose.msra.mxu0 0.0
    %2146 = vmatpush.xpose.msra.mxu0 %v525
    %2147 = vmatmul.f32.gmra.mxu0 %v238
    %v2148 = vpop.f32.mrf.mxu0
    %v2149 = vadd.f32 %v2129, %v2148
    %2150 = vdwg.mxu0
    %2151 = vmatpush.xpose.msra.mxu0 0.0
    %2152 = vmatpush.xpose.msra.mxu0 0.0
    %2153 = vmatpush.xpose.msra.mxu0 0.0
    %2154 = vmatpush.xpose.msra.mxu0 0.0
    %2155 = vmatpush.xpose.msra.mxu0 0.0
    %2156 = vmatpush.xpose.msra.mxu0 0.0
    %2157 = vmatpush.xpose.msra.mxu0 0.0
    %2158 = vmatpush.xpose.msra.mxu0 0.0
    %2159 = vmatpush.xpose.msra.mxu0 0.0
    %2160 = vmatpush.xpose.msra.mxu0 0.0
    %2161 = vmatpush.xpose.msra.mxu0 0.0
    %2162 = vmatpush.xpose.msra.mxu0 0.0
    %2163 = vmatpush.xpose.msra.mxu0 0.0
    %2164 = vmatpush.xpose.msra.mxu0 0.0
    %2165 = vmatpush.xpose.msra.mxu0 0.0
    %2166 = vmatpush.xpose.msra.mxu0 %v526
    %2167 = vmatmul.f32.gmra.mxu0 %v239
    %v2168 = vpop.f32.mrf.mxu0
    %v2169 = vadd.f32 %v2149, %v2168
    %2170 = vdwg.mxu0
    %2171 = vmatpush.xpose.msra.mxu0 0.0
    %2172 = vmatpush.xpose.msra.mxu0 0.0
    %2173 = vmatpush.xpose.msra.mxu0 0.0
    %2174 = vmatpush.xpose.msra.mxu0 0.0
    %2175 = vmatpush.xpose.msra.mxu0 0.0
    %2176 = vmatpush.xpose.msra.mxu0 0.0
    %2177 = vmatpush.xpose.msra.mxu0 0.0
    %2178 = vmatpush.xpose.msra.mxu0 0.0
    %2179 = vmatpush.xpose.msra.mxu0 0.0
    %2180 = vmatpush.xpose.msra.mxu0 0.0
    %2181 = vmatpush.xpose.msra.mxu0 0.0
    %2182 = vmatpush.xpose.msra.mxu0 0.0
    %2183 = vmatpush.xpose.msra.mxu0 0.0
    %2184 = vmatpush.xpose.msra.mxu0 0.0
    %2185 = vmatpush.xpose.msra.mxu0 0.0
    %2186 = vmatpush.xpose.msra.mxu0 %v527
    %2187 = vmatmul.f32.gmra.mxu0 %v240
    %v2188 = vpop.f32.mrf.mxu0
    %v2189 = vadd.f32 %v2169, %v2188
    %2190 = vdwg.mxu0
    %2191 = vmatpush.xpose.msra.mxu0 0.0
    %2192 = vmatpush.xpose.msra.mxu0 0.0
    %2193 = vmatpush.xpose.msra.mxu0 0.0
    %2194 = vmatpush.xpose.msra.mxu0 0.0
    %2195 = vmatpush.xpose.msra.mxu0 0.0
    %2196 = vmatpush.xpose.msra.mxu0 0.0
    %2197 = vmatpush.xpose.msra.mxu0 0.0
    %2198 = vmatpush.xpose.msra.mxu0 0.0
    %2199 = vmatpush.xpose.msra.mxu0 0.0
    %2200 = vmatpush.xpose.msra.mxu0 0.0
    %2201 = vmatpush.xpose.msra.mxu0 0.0
    %2202 = vmatpush.xpose.msra.mxu0 0.0
    %2203 = vmatpush.xpose.msra.mxu0 0.0
    %2204 = vmatpush.xpose.msra.mxu0 0.0
    %2205 = vmatpush.xpose.msra.mxu0 0.0
    %2206 = vmatpush.xpose.msra.mxu0 %v528
    %2207 = vmatmul.f32.gmra.mxu0 %v241
    %v2208 = vpop.f32.mrf.mxu0
    %v2209 = vadd.f32 %v2189, %v2208
    %2210 = vdwg.mxu0
    %2211 = vmatpush.xpose.msra.mxu0 0.0
    %2212 = vmatpush.xpose.msra.mxu0 0.0
    %2213 = vmatpush.xpose.msra.mxu0 0.0
    %2214 = vmatpush.xpose.msra.mxu0 0.0
    %2215 = vmatpush.xpose.msra.mxu0 0.0
    %2216 = vmatpush.xpose.msra.mxu0 0.0
    %2217 = vmatpush.xpose.msra.mxu0 0.0
    %2218 = vmatpush.xpose.msra.mxu0 0.0
    %2219 = vmatpush.xpose.msra.mxu0 0.0
    %2220 = vmatpush.xpose.msra.mxu0 0.0
    %2221 = vmatpush.xpose.msra.mxu0 0.0
    %2222 = vmatpush.xpose.msra.mxu0 0.0
    %2223 = vmatpush.xpose.msra.mxu0 0.0
    %2224 = vmatpush.xpose.msra.mxu0 0.0
    %2225 = vmatpush.xpose.msra.mxu0 0.0
    %2226 = vmatpush.xpose.msra.mxu0 %v529
    %2227 = vmatmul.f32.gmra.mxu0 %v242
    %v2228 = vpop.f32.mrf.mxu0
    %v2229 = vadd.f32 %v2209, %v2228
    %2230 = vdwg.mxu0
    %2231 = vmatpush.xpose.msra.mxu0 0.0
    %2232 = vmatpush.xpose.msra.mxu0 0.0
    %2233 = vmatpush.xpose.msra.mxu0 0.0
    %2234 = vmatpush.xpose.msra.mxu0 0.0
    %2235 = vmatpush.xpose.msra.mxu0 0.0
    %2236 = vmatpush.xpose.msra.mxu0 0.0
    %2237 = vmatpush.xpose.msra.mxu0 0.0
    %2238 = vmatpush.xpose.msra.mxu0 0.0
    %2239 = vmatpush.xpose.msra.mxu0 0.0
    %2240 = vmatpush.xpose.msra.mxu0 0.0
    %2241 = vmatpush.xpose.msra.mxu0 0.0
    %2242 = vmatpush.xpose.msra.mxu0 0.0
    %2243 = vmatpush.xpose.msra.mxu0 0.0
    %2244 = vmatpush.xpose.msra.mxu0 0.0
    %2245 = vmatpush.xpose.msra.mxu0 0.0
    %2246 = vmatpush.xpose.msra.mxu0 %v530
    %2247 = vmatmul.f32.gmra.mxu0 %v243
    %v2248 = vpop.f32.mrf.mxu0
    %v2249 = vadd.f32 %v2229, %v2248
    %2250 = vdwg.mxu0
    %2251 = vmatpush.xpose.msra.mxu0 0.0
    %2252 = vmatpush.xpose.msra.mxu0 0.0
    %2253 = vmatpush.xpose.msra.mxu0 0.0
    %2254 = vmatpush.xpose.msra.mxu0 0.0
    %2255 = vmatpush.xpose.msra.mxu0 0.0
    %2256 = vmatpush.xpose.msra.mxu0 0.0
    %2257 = vmatpush.xpose.msra.mxu0 0.0
    %2258 = vmatpush.xpose.msra.mxu0 0.0
    %2259 = vmatpush.xpose.msra.mxu0 0.0
    %2260 = vmatpush.xpose.msra.mxu0 0.0
    %2261 = vmatpush.xpose.msra.mxu0 0.0
    %2262 = vmatpush.xpose.msra.mxu0 0.0
    %2263 = vmatpush.xpose.msra.mxu0 0.0
    %2264 = vmatpush.xpose.msra.mxu0 0.0
    %2265 = vmatpush.xpose.msra.mxu0 0.0
    %2266 = vmatpush.xpose.msra.mxu0 %v535
    %2267 = vmatmul.f32.gmra.mxu0 %v246
    %v2268 = vpop.f32.mrf.mxu0
    %v2269 = vadd.f32 %v2249, %v2268
    %2270 = vdwg.mxu0
    %2271 = vmatpush.xpose.msra.mxu0 0.0
    %2272 = vmatpush.xpose.msra.mxu0 0.0
    %2273 = vmatpush.xpose.msra.mxu0 0.0
    %2274 = vmatpush.xpose.msra.mxu0 0.0
    %2275 = vmatpush.xpose.msra.mxu0 0.0
    %2276 = vmatpush.xpose.msra.mxu0 0.0
    %2277 = vmatpush.xpose.msra.mxu0 0.0
    %2278 = vmatpush.xpose.msra.mxu0 0.0
    %2279 = vmatpush.xpose.msra.mxu0 0.0
    %2280 = vmatpush.xpose.msra.mxu0 0.0
    %2281 = vmatpush.xpose.msra.mxu0 0.0
    %2282 = vmatpush.xpose.msra.mxu0 0.0
    %2283 = vmatpush.xpose.msra.mxu0 0.0
    %2284 = vmatpush.xpose.msra.mxu0 0.0
    %2285 = vmatpush.xpose.msra.mxu0 0.0
    %2286 = vmatpush.xpose.msra.mxu0 %v536
    %2287 = vmatmul.f32.gmra.mxu0 %v247
    %v2288 = vpop.f32.mrf.mxu0
    %v2289 = vadd.f32 %v2269, %v2288
    %2290 = vdwg.mxu0
    %2291 = vmatpush.xpose.msra.mxu0 0.0
    %2292 = vmatpush.xpose.msra.mxu0 0.0
    %2293 = vmatpush.xpose.msra.mxu0 0.0
    %2294 = vmatpush.xpose.msra.mxu0 0.0
    %2295 = vmatpush.xpose.msra.mxu0 0.0
    %2296 = vmatpush.xpose.msra.mxu0 0.0
    %2297 = vmatpush.xpose.msra.mxu0 0.0
    %2298 = vmatpush.xpose.msra.mxu0 0.0
    %2299 = vmatpush.xpose.msra.mxu0 0.0
    %2300 = vmatpush.xpose.msra.mxu0 0.0
    %2301 = vmatpush.xpose.msra.mxu0 0.0
    %2302 = vmatpush.xpose.msra.mxu0 0.0
    %2303 = vmatpush.xpose.msra.mxu0 0.0
    %2304 = vmatpush.xpose.msra.mxu0 0.0
    %2305 = vmatpush.xpose.msra.mxu0 0.0
    %2306 = vmatpush.xpose.msra.mxu0 %v537
    %2307 = vmatmul.f32.gmra.mxu0 %v248
    %v2308 = vpop.f32.mrf.mxu0
    %v2309 = vadd.f32 %v2289, %v2308
    %2310 = vdwg.mxu0
    %2311 = vmatpush.xpose.msra.mxu0 0.0
    %2312 = vmatpush.xpose.msra.mxu0 0.0
    %2313 = vmatpush.xpose.msra.mxu0 0.0
    %2314 = vmatpush.xpose.msra.mxu0 0.0
    %2315 = vmatpush.xpose.msra.mxu0 0.0
    %2316 = vmatpush.xpose.msra.mxu0 0.0
    %2317 = vmatpush.xpose.msra.mxu0 0.0
    %2318 = vmatpush.xpose.msra.mxu0 0.0
    %2319 = vmatpush.xpose.msra.mxu0 0.0
    %2320 = vmatpush.xpose.msra.mxu0 0.0
    %2321 = vmatpush.xpose.msra.mxu0 0.0
    %2322 = vmatpush.xpose.msra.mxu0 0.0
    %2323 = vmatpush.xpose.msra.mxu0 0.0
    %2324 = vmatpush.xpose.msra.mxu0 0.0
    %2325 = vmatpush.xpose.msra.mxu0 0.0
    %2326 = vmatpush.xpose.msra.mxu0 %v538
    %2327 = vmatmul.f32.gmra.mxu0 %v249
    %v2328 = vpop.f32.mrf.mxu0
    %v2329 = vadd.f32 %v2309, %v2328
    %2330 = vdwg.mxu0
    %2331 = vmatpush.xpose.msra.mxu0 0.0
    %2332 = vmatpush.xpose.msra.mxu0 0.0
    %2333 = vmatpush.xpose.msra.mxu0 0.0
    %2334 = vmatpush.xpose.msra.mxu0 0.0
    %2335 = vmatpush.xpose.msra.mxu0 0.0
    %2336 = vmatpush.xpose.msra.mxu0 0.0
    %2337 = vmatpush.xpose.msra.mxu0 0.0
    %2338 = vmatpush.xpose.msra.mxu0 0.0
    %2339 = vmatpush.xpose.msra.mxu0 0.0
    %2340 = vmatpush.xpose.msra.mxu0 0.0
    %2341 = vmatpush.xpose.msra.mxu0 0.0
    %2342 = vmatpush.xpose.msra.mxu0 0.0
    %2343 = vmatpush.xpose.msra.mxu0 0.0
    %2344 = vmatpush.xpose.msra.mxu0 0.0
    %2345 = vmatpush.xpose.msra.mxu0 0.0
    %2346 = vmatpush.xpose.msra.mxu0 %v539
    %2347 = vmatmul.f32.gmra.mxu0 %v250
    %v2348 = vpop.f32.mrf.mxu0
    %v2349 = vadd.f32 %v2329, %v2348
    %2350 = vdwg.mxu0
    %2351 = vmatpush.xpose.msra.mxu0 0.0
    %2352 = vmatpush.xpose.msra.mxu0 0.0
    %2353 = vmatpush.xpose.msra.mxu0 0.0
    %2354 = vmatpush.xpose.msra.mxu0 0.0
    %2355 = vmatpush.xpose.msra.mxu0 0.0
    %2356 = vmatpush.xpose.msra.mxu0 0.0
    %2357 = vmatpush.xpose.msra.mxu0 0.0
    %2358 = vmatpush.xpose.msra.mxu0 0.0
    %2359 = vmatpush.xpose.msra.mxu0 0.0
    %2360 = vmatpush.xpose.msra.mxu0 0.0
    %2361 = vmatpush.xpose.msra.mxu0 0.0
    %2362 = vmatpush.xpose.msra.mxu0 0.0
    %2363 = vmatpush.xpose.msra.mxu0 0.0
    %2364 = vmatpush.xpose.msra.mxu0 0.0
    %2365 = vmatpush.xpose.msra.mxu0 0.0
    %2366 = vmatpush.xpose.msra.mxu0 %v540
    %2367 = vmatmul.f32.gmra.mxu0 %v251
    %v2368 = vpop.f32.mrf.mxu0
    %v2369 = vadd.f32 %v2349, %v2368
    %2370 = vdwg.mxu0
    %2371 = vmatpush.xpose.msra.mxu0 0.0
    %2372 = vmatpush.xpose.msra.mxu0 0.0
    %2373 = vmatpush.xpose.msra.mxu0 0.0
    %2374 = vmatpush.xpose.msra.mxu0 0.0
    %2375 = vmatpush.xpose.msra.mxu0 0.0
    %2376 = vmatpush.xpose.msra.mxu0 0.0
    %2377 = vmatpush.xpose.msra.mxu0 0.0
    %2378 = vmatpush.xpose.msra.mxu0 0.0
    %2379 = vmatpush.xpose.msra.mxu0 0.0
    %2380 = vmatpush.xpose.msra.mxu0 0.0
    %2381 = vmatpush.xpose.msra.mxu0 0.0
    %2382 = vmatpush.xpose.msra.mxu0 0.0
    %2383 = vmatpush.xpose.msra.mxu0 0.0
    %2384 = vmatpush.xpose.msra.mxu0 0.0
    %2385 = vmatpush.xpose.msra.mxu0 0.0
    %2386 = vmatpush.xpose.msra.mxu0 %v541
    %2387 = vmatmul.f32.gmra.mxu0 %v252
    %v2388 = vpop.f32.mrf.mxu0
    %v2389 = vadd.f32 %v2369, %v2388
    %2390 = vdwg.mxu0
    %2391 = vmatpush.xpose.msra.mxu0 0.0
    %2392 = vmatpush.xpose.msra.mxu0 0.0
    %2393 = vmatpush.xpose.msra.mxu0 0.0
    %2394 = vmatpush.xpose.msra.mxu0 0.0
    %2395 = vmatpush.xpose.msra.mxu0 0.0
    %2396 = vmatpush.xpose.msra.mxu0 0.0
    %2397 = vmatpush.xpose.msra.mxu0 0.0
    %2398 = vmatpush.xpose.msra.mxu0 0.0
    %2399 = vmatpush.xpose.msra.mxu0 0.0
    %2400 = vmatpush.xpose.msra.mxu0 0.0
    %2401 = vmatpush.xpose.msra.mxu0 0.0
    %2402 = vmatpush.xpose.msra.mxu0 0.0
    %2403 = vmatpush.xpose.msra.mxu0 0.0
    %2404 = vmatpush.xpose.msra.mxu0 0.0
    %2405 = vmatpush.xpose.msra.mxu0 0.0
    %2406 = vmatpush.xpose.msra.mxu0 %v542
    %2407 = vmatmul.f32.gmra.mxu0 %v253
    %v2408 = vpop.f32.mrf.mxu0
    %v2409 = vadd.f32 %v2389, %v2408
    %2410 = vdwg.mxu0
    %2411 = vmatpush.xpose.msra.mxu0 0.0
    %2412 = vmatpush.xpose.msra.mxu0 0.0
    %2413 = vmatpush.xpose.msra.mxu0 0.0
    %2414 = vmatpush.xpose.msra.mxu0 0.0
    %2415 = vmatpush.xpose.msra.mxu0 0.0
    %2416 = vmatpush.xpose.msra.mxu0 0.0
    %2417 = vmatpush.xpose.msra.mxu0 0.0
    %2418 = vmatpush.xpose.msra.mxu0 0.0
    %2419 = vmatpush.xpose.msra.mxu0 0.0
    %2420 = vmatpush.xpose.msra.mxu0 0.0
    %2421 = vmatpush.xpose.msra.mxu0 0.0
    %2422 = vmatpush.xpose.msra.mxu0 0.0
    %2423 = vmatpush.xpose.msra.mxu0 0.0
    %2424 = vmatpush.xpose.msra.mxu0 0.0
    %2425 = vmatpush.xpose.msra.mxu0 0.0
    %2426 = vmatpush.xpose.msra.mxu0 %v547
    %2427 = vmatmul.f32.gmra.mxu0 %v256
    %v2428 = vpop.f32.mrf.mxu0
    %v2429 = vadd.f32 %v2409, %v2428
    %2430 = vdwg.mxu0
    %2431 = vmatpush.xpose.msra.mxu0 0.0
    %2432 = vmatpush.xpose.msra.mxu0 0.0
    %2433 = vmatpush.xpose.msra.mxu0 0.0
    %2434 = vmatpush.xpose.msra.mxu0 0.0
    %2435 = vmatpush.xpose.msra.mxu0 0.0
    %2436 = vmatpush.xpose.msra.mxu0 0.0
    %2437 = vmatpush.xpose.msra.mxu0 0.0
    %2438 = vmatpush.xpose.msra.mxu0 0.0
    %2439 = vmatpush.xpose.msra.mxu0 0.0
    %2440 = vmatpush.xpose.msra.mxu0 0.0
    %2441 = vmatpush.xpose.msra.mxu0 0.0
    %2442 = vmatpush.xpose.msra.mxu0 0.0
    %2443 = vmatpush.xpose.msra.mxu0 0.0
    %2444 = vmatpush.xpose.msra.mxu0 0.0
    %2445 = vmatpush.xpose.msra.mxu0 0.0
    %2446 = vmatpush.xpose.msra.mxu0 %v548
    %2447 = vmatmul.f32.gmra.mxu0 %v257
    %v2448 = vpop.f32.mrf.mxu0
    %v2449 = vadd.f32 %v2429, %v2448
    %2450 = vdwg.mxu0
    %2451 = vmatpush.xpose.msra.mxu0 0.0
    %2452 = vmatpush.xpose.msra.mxu0 0.0
    %2453 = vmatpush.xpose.msra.mxu0 0.0
    %2454 = vmatpush.xpose.msra.mxu0 0.0
    %2455 = vmatpush.xpose.msra.mxu0 0.0
    %2456 = vmatpush.xpose.msra.mxu0 0.0
    %2457 = vmatpush.xpose.msra.mxu0 0.0
    %2458 = vmatpush.xpose.msra.mxu0 0.0
    %2459 = vmatpush.xpose.msra.mxu0 0.0
    %2460 = vmatpush.xpose.msra.mxu0 0.0
    %2461 = vmatpush.xpose.msra.mxu0 0.0
    %2462 = vmatpush.xpose.msra.mxu0 0.0
    %2463 = vmatpush.xpose.msra.mxu0 0.0
    %2464 = vmatpush.xpose.msra.mxu0 0.0
    %2465 = vmatpush.xpose.msra.mxu0 0.0
    %2466 = vmatpush.xpose.msra.mxu0 %v549
    %2467 = vmatmul.f32.gmra.mxu0 %v258
    %v2468 = vpop.f32.mrf.mxu0
    %v2469 = vadd.f32 %v2449, %v2468
    %2470 = vdwg.mxu0
    %2471 = vmatpush.xpose.msra.mxu0 0.0
    %2472 = vmatpush.xpose.msra.mxu0 0.0
    %2473 = vmatpush.xpose.msra.mxu0 0.0
    %2474 = vmatpush.xpose.msra.mxu0 0.0
    %2475 = vmatpush.xpose.msra.mxu0 0.0
    %2476 = vmatpush.xpose.msra.mxu0 0.0
    %2477 = vmatpush.xpose.msra.mxu0 0.0
    %2478 = vmatpush.xpose.msra.mxu0 0.0
    %2479 = vmatpush.xpose.msra.mxu0 0.0
    %2480 = vmatpush.xpose.msra.mxu0 0.0
    %2481 = vmatpush.xpose.msra.mxu0 0.0
    %2482 = vmatpush.xpose.msra.mxu0 0.0
    %2483 = vmatpush.xpose.msra.mxu0 0.0
    %2484 = vmatpush.xpose.msra.mxu0 0.0
    %2485 = vmatpush.xpose.msra.mxu0 0.0
    %2486 = vmatpush.xpose.msra.mxu0 %v550
    %2487 = vmatmul.f32.gmra.mxu0 %v259
    %v2488 = vpop.f32.mrf.mxu0
    %v2489 = vadd.f32 %v2469, %v2488
    %2490 = vdwg.mxu0
    %2491 = vmatpush.xpose.msra.mxu0 0.0
    %2492 = vmatpush.xpose.msra.mxu0 0.0
    %2493 = vmatpush.xpose.msra.mxu0 0.0
    %2494 = vmatpush.xpose.msra.mxu0 0.0
    %2495 = vmatpush.xpose.msra.mxu0 0.0
    %2496 = vmatpush.xpose.msra.mxu0 0.0
    %2497 = vmatpush.xpose.msra.mxu0 0.0
    %2498 = vmatpush.xpose.msra.mxu0 0.0
    %2499 = vmatpush.xpose.msra.mxu0 0.0
    %2500 = vmatpush.xpose.msra.mxu0 0.0
    %2501 = vmatpush.xpose.msra.mxu0 0.0
    %2502 = vmatpush.xpose.msra.mxu0 0.0
    %2503 = vmatpush.xpose.msra.mxu0 0.0
    %2504 = vmatpush.xpose.msra.mxu0 0.0
    %2505 = vmatpush.xpose.msra.mxu0 0.0
    %2506 = vmatpush.xpose.msra.mxu0 %v551
    %2507 = vmatmul.f32.gmra.mxu0 %v260
    %v2508 = vpop.f32.mrf.mxu0
    %v2509 = vadd.f32 %v2489, %v2508
    %2510 = vdwg.mxu0
    %2511 = vmatpush.xpose.msra.mxu0 0.0
    %2512 = vmatpush.xpose.msra.mxu0 0.0
    %2513 = vmatpush.xpose.msra.mxu0 0.0
    %2514 = vmatpush.xpose.msra.mxu0 0.0
    %2515 = vmatpush.xpose.msra.mxu0 0.0
    %2516 = vmatpush.xpose.msra.mxu0 0.0
    %2517 = vmatpush.xpose.msra.mxu0 0.0
    %2518 = vmatpush.xpose.msra.mxu0 0.0
    %2519 = vmatpush.xpose.msra.mxu0 0.0
    %2520 = vmatpush.xpose.msra.mxu0 0.0
    %2521 = vmatpush.xpose.msra.mxu0 0.0
    %2522 = vmatpush.xpose.msra.mxu0 0.0
    %2523 = vmatpush.xpose.msra.mxu0 0.0
    %2524 = vmatpush.xpose.msra.mxu0 0.0
    %2525 = vmatpush.xpose.msra.mxu0 0.0
    %2526 = vmatpush.xpose.msra.mxu0 %v552
    %2527 = vmatmul.f32.gmra.mxu0 %v261
    %v2528 = vpop.f32.mrf.mxu0
    %v2529 = vadd.f32 %v2509, %v2528
    %2530 = vdwg.mxu0
    %2531 = vmatpush.xpose.msra.mxu0 0.0
    %2532 = vmatpush.xpose.msra.mxu0 0.0
    %2533 = vmatpush.xpose.msra.mxu0 0.0
    %2534 = vmatpush.xpose.msra.mxu0 0.0
    %2535 = vmatpush.xpose.msra.mxu0 0.0
    %2536 = vmatpush.xpose.msra.mxu0 0.0
    %2537 = vmatpush.xpose.msra.mxu0 0.0
    %2538 = vmatpush.xpose.msra.mxu0 0.0
    %2539 = vmatpush.xpose.msra.mxu0 0.0
    %2540 = vmatpush.xpose.msra.mxu0 0.0
    %2541 = vmatpush.xpose.msra.mxu0 0.0
    %2542 = vmatpush.xpose.msra.mxu0 0.0
    %2543 = vmatpush.xpose.msra.mxu0 0.0
    %2544 = vmatpush.xpose.msra.mxu0 0.0
    %2545 = vmatpush.xpose.msra.mxu0 0.0
    %2546 = vmatpush.xpose.msra.mxu0 %v553
    %2547 = vmatmul.f32.gmra.mxu0 %v262
    %v2548 = vpop.f32.mrf.mxu0
    %v2549 = vadd.f32 %v2529, %v2548
    %2550 = vdwg.mxu0
    %2551 = vmatpush.xpose.msra.mxu0 0.0
    %2552 = vmatpush.xpose.msra.mxu0 0.0
    %2553 = vmatpush.xpose.msra.mxu0 0.0
    %2554 = vmatpush.xpose.msra.mxu0 0.0
    %2555 = vmatpush.xpose.msra.mxu0 0.0
    %2556 = vmatpush.xpose.msra.mxu0 0.0
    %2557 = vmatpush.xpose.msra.mxu0 0.0
    %2558 = vmatpush.xpose.msra.mxu0 0.0
    %2559 = vmatpush.xpose.msra.mxu0 0.0
    %2560 = vmatpush.xpose.msra.mxu0 0.0
    %2561 = vmatpush.xpose.msra.mxu0 0.0
    %2562 = vmatpush.xpose.msra.mxu0 0.0
    %2563 = vmatpush.xpose.msra.mxu0 0.0
    %2564 = vmatpush.xpose.msra.mxu0 0.0
    %2565 = vmatpush.xpose.msra.mxu0 0.0
    %2566 = vmatpush.xpose.msra.mxu0 %v554
    %2567 = vmatmul.f32.gmra.mxu0 %v263
    %v2568 = vpop.f32.mrf.mxu0
    %v2569 = vadd.f32 %v2549, %v2568
    %2570 = vdwg.mxu0
    %vm2571 = vcmask 17408
    %2572 = vst.msk [vmem:[#allocation7] sm:$0x3] %vm2571, %v2569
    // Predicated region
    $region22: #{tpu_custom_call.1} parent=1 // pred_check
      _
    $region23: #{tpu_custom_call.1} parent=1 // pred_check_branch
      %2574 = sbr.rel (0) target = $region25
    $region24: #{tpu_custom_call.1} parent=1 // pred_region
      %2576 = vsyncadd [#allocation4], 0
      %s2578 = sshll.u32 [#allocation7], 4
      %s2579 = int_to_ptr.vmem [resolvable:$true] %s2578
      %s2580 = sshll.u32 %s3, 4
      %s2581 = int_to_ptr.hbm [resolvable:$true] %s2580
      %2583 = dma.vmem_to_hbm [thread:$0]  %s2579, 32, %s2581, [#allocation4]
    $region25: #{tpu_custom_call.1} parent=1 // pred_fallthru
      _
    // Predicated region
    $region26: #{tpu_custom_call.1} parent=1 // pred_check
      _
    $region27: #{tpu_custom_call.1} parent=1 // pred_check_branch
      %2585 = sbr.rel (0) target = $region29
    $region28: #{tpu_custom_call.1} parent=1 // pred_region
      %2587 = dma.done [#allocation4], 32
    $region29: #{tpu_custom_call.1} parent=1 // pred_fallthru
      _
    %2588 = vsyncpa [#allocation3], 1
    %2589 = vsyncpa [#allocation6], 1
    %2590 = vsyncpa [#allocation4], 1

</llo_original>
